<compile_context>
chip_gen: v7x
topology: tpu7x:2x2x1
jax: 0.10.0
libtpu: 0.0.40
codegen_flags: <defaults>
</compile_context>

<pallas_src>
import jax
import jax.numpy as jnp
from jax.experimental import pallas as pl
from jax.experimental.pallas import tpu as pltpu


def _round_up(n, m):
    return ((n + m - 1) // m) * m


def _num_tensorcores_per_chip():
    """Best-effort TensorCore-per-chip count (v7x=2, v5e/v6e=1). Defaults to 1."""
    try:
        info = pltpu.get_tpu_info()
        for name in ("num_cores", "num_tensorcores", "num_cores_per_chip",
                     "tensorcores_per_chip", "cores_per_chip"):
            v = getattr(info, name, None)
            if isinstance(v, int) and v > 0:
                return v
    except Exception:
        pass
    try:
        dev = jax.devices()[0]
        v = getattr(dev, "num_cores", None)
        if isinstance(v, int) and v > 0:
            return v
        kind = str(getattr(dev, "device_kind", "")).lower()
        if "v7" in kind or "7x" in kind:
            return 2
    except Exception:
        pass
    return 1


def _decoder_kernel(z_ref, w1_ref, b1_ref, w2_ref, b2_ref, out_ref):
    # First linear (bf16 operands, f32 accumulation on the MXU) + bias + ReLU.
    h = jnp.dot(z_ref[...], w1_ref[...], preferred_element_type=jnp.float32)
    h = jnp.maximum(h + b1_ref[0, :], 0.0)          # (TB, Hp) + (Hp,) sublane bcast
    # Second linear (over this grid step's N-tile of w2) + bias + sigmoid.
    o = jnp.dot(h.astype(jnp.bfloat16), w2_ref[...],
                preferred_element_type=jnp.float32)
    o = o + b2_ref[0, :]                            # (TB, TN) + (TN,)
    # sigmoid(o) == 0.5 * tanh(0.5 * o) + 0.5  — single EUP transcendental.
    sig = 0.5 * jnp.tanh(0.5 * o) + 0.5
    out_ref[...] = sig.astype(out_ref.dtype)


def decoder_forward(z, w1, b1, w2, b2, out_dtype=jnp.bfloat16):
    """z: (B, z_dim) f32; w1: (z_dim, H); b1: (H,)|(1,H); w2: (H, X); b2: (X,)|(1,X)."""
    B, zd = z.shape
    H, X = w2.shape

    n_cores = _num_tensorcores_per_chip()

    # ---- batch tiling: single sublane-aligned block at small/medium B;
    # 512-row tiles ("parallel") at large B.
    if B <= 512:
        tile_b = _round_up(B, 8)
    else:
        tile_b = 512
    Bp = _round_up(B, tile_b)
    n_b = Bp // tile_b

    # ---- output-feature split: only when a single batch tile would otherwise
    # leave the second TensorCore (v7x) idle.  Each tile is a multiple of 128
    # lanes (Xp padded accordingly), so stores stay unmasked and lane-dense.
    n_split = 2 if (n_cores >= 2 and n_b == 1 and X >= 256) else 1
    Xp = _round_up(X, 128 * n_split)
    tile_n = Xp // n_split

    Kp = _round_up(zd, 128)       # lane-aligned LHS (z) loads
    Hp = _round_up(H, 128)

    # ---- wrapper-side layout prep: zero padding is semantics-neutral
    # (ReLU(0)=0, zero rows/cols of the weights contribute nothing; padded
    # output rows/cols are sliced away below).
    zb = jnp.zeros((Bp, Kp), jnp.bfloat16).at[:B, :zd].set(z.astype(jnp.bfloat16))
    w1p = jnp.zeros((Kp, Hp), jnp.bfloat16).at[:zd, :H].set(w1.astype(jnp.bfloat16))
    b1p = jnp.zeros((1, Hp), jnp.float32).at[:, :H].set(
        b1.reshape(1, H).astype(jnp.float32))
    w2p = jnp.zeros((Hp, Xp), jnp.bfloat16).at[:H, :X].set(w2.astype(jnp.bfloat16))
    b2p = jnp.zeros((1, Xp), jnp.float32).at[:, :X].set(
        b2.reshape(1, X).astype(jnp.float32))

    grid = (n_b, n_split)

    out = pl.pallas_call(
        _decoder_kernel,
        out_shape=jax.ShapeDtypeStruct((Bp, Xp), out_dtype),
        grid=grid,
        in_specs=[
            pl.BlockSpec((tile_b, Kp), lambda i, j: (i, 0)),
            pl.BlockSpec((Kp, Hp), lambda i, j: (0, 0)),
            pl.BlockSpec((1, Hp), lambda i, j: (0, 0)),
            pl.BlockSpec((Hp, tile_n), lambda i, j: (0, j)),
            pl.BlockSpec((1, tile_n), lambda i, j: (0, j)),
        ],
        out_specs=pl.BlockSpec((tile_b, tile_n), lambda i, j: (i, j)),
        compiler_params=pltpu.CompilerParams(
            dimension_semantics=("parallel", "parallel")),
    )(zb, w1p, b1p, w2p, b2p)

    return out[:B, :X]


def make_params(key, z_dim, hidden_dim, x_dim):
    """Deterministic synthetic parameters (PyTorch Linear weights pre-transposed)."""
    k1, k2, k3, k4 = jax.random.split(key, 4)
    w1 = jax.random.normal(k1, (z_dim, hidden_dim), jnp.float32) * 0.1
    b1 = jax.random.normal(k2, (hidden_dim,), jnp.float32) * 0.1
    w2 = jax.random.normal(k3, (hidden_dim, x_dim), jnp.float32) * 0.1
    b2 = jax.random.normal(k4, (x_dim,), jnp.float32) * 0.1
    return w1, b1, w2, b2


def decoder_ref_f32(z, w1, b1, w2, b2):
    """Pure-JAX f32 reference mirroring the PyTorch module semantics."""
    h = jnp.maximum(z @ w1 + b1.reshape(1, -1), 0.0)
    return jax.nn.sigmoid(h @ w2 + b2.reshape(1, -1))


def decoder_ref_bf16(z, w1, b1, w2, b2):
    """Reference with the same bf16-operand / f32-accumulate matmuls as the kernel."""
    h = jnp.dot(z.astype(jnp.bfloat16), w1.astype(jnp.bfloat16),
                preferred_element_type=jnp.float32) + b1.reshape(1, -1)
    h = jnp.maximum(h, 0.0)
    o = jnp.dot(h.astype(jnp.bfloat16), w2.astype(jnp.bfloat16),
                preferred_element_type=jnp.float32) + b2.reshape(1, -1)
    return jax.nn.sigmoid(o)


if __name__ == "__main__":
    # Shapes consistent with the module: x_dim=784 (MNIST), default hidden=500.
    batch, z_dim, hidden_dim, x_dim = 8, 20, 500, 784

    key = jax.random.PRNGKey(0)
    kz, kp = jax.random.split(key)
    z = jax.random.normal(kz, (batch, z_dim), jnp.float32)
    w1, b1, w2, b2 = make_params(kp, z_dim, hidden_dim, x_dim)

    mean = decoder_forward(z, w1, b1, w2, b2)          # bf16 output (default)
    mean = jax.block_until_ready(mean)
    mean32 = mean.astype(jnp.float32)

    ref_bf16 = decoder_ref_bf16(z, w1, b1, w2, b2)
    ref_f32 = decoder_ref_f32(z, w1, b1, w2, b2)

    assert mean.shape == (batch, x_dim)
    # Matched-precision reference (same bf16 matmuls): tight modulo the bf16 output cast.
    assert jnp.allclose(mean32, ref_bf16, atol=2e-2, rtol=0.0)
    # Full-f32 reference: loose check (bf16 MXU operands + bf16 output store).
    assert jnp.allclose(mean32, ref_f32, atol=3e-2, rtol=0.0)

    print("KERNEL_OK")
</pallas_src>

<mosaic_0001>
module attributes {stable_mosaic.version = 11 : i64} {
  func.func @_decoder_kernel(%arg0: i32, %arg1: i32, %arg2: memref<8x128xbf16, #tpu.memory_space<vmem>>, %arg3: memref<128x512xbf16, #tpu.memory_space<vmem>>, %arg4: memref<1x512xf32, #tpu.memory_space<vmem>>, %arg5: memref<512x896xbf16, #tpu.memory_space<vmem>>, %arg6: memref<1x896xf32, #tpu.memory_space<vmem>>, %arg7: memref<8x896xbf16, #tpu.memory_space<vmem>>) attributes {dimension_semantics = [#tpu.dimension_semantics<parallel>, #tpu.dimension_semantics<parallel>], iteration_bounds = array<i64: 1, 1>, scalar_prefetch = 0 : i64, scratch_operands = 0 : i64, tpu.core_type = #tpu.core_type<tc>, window_params = [{transform_indices = @transform_0, window_bounds = array<i64: 8, 128>}, {pipeline_mode = #tpu.pipeline_mode<synchronous>, transform_indices = @transform_1, window_bounds = array<i64: 128, 512>}, {pipeline_mode = #tpu.pipeline_mode<synchronous>, transform_indices = @transform_2, window_bounds = array<i64: 1, 512>}, {transform_indices = @transform_3, window_bounds = array<i64: 512, 896>}, {transform_indices = @transform_4, window_bounds = array<i64: 1, 896>}, {transform_indices = @transform_5, window_bounds = array<i64: 8, 896>}]} {
    %c0 = arith.constant 0 : index
    %c0_0 = arith.constant 0 : index
    %0 = vector.load %arg2[%c0, %c0_0] : memref<8x128xbf16, #tpu.memory_space<vmem>>, vector<8x128xbf16>
    %c0_1 = arith.constant 0 : index
    %c0_2 = arith.constant 0 : index
    %1 = vector.load %arg3[%c0_1, %c0_2] : memref<128x512xbf16, #tpu.memory_space<vmem>>, vector<128x512xbf16>
    %cst = arith.constant dense<0.000000e+00> : vector<8x512xf32>
    %2 = tpu.matmul %0, %1, %cst {dimension_numbers = #tpu.dot_dimension_numbers<[1], [0], [0], [1], [0, 0, 1, 1], [], []>} : vector<8x128xbf16>, vector<128x512xbf16>, vector<8x512xf32> -> vector<8x512xf32>
    %c0_3 = arith.constant 0 : index
    %c0_4 = arith.constant 0 : index
    %3 = vector.load %arg4[%c0_3, %c0_4] : memref<1x512xf32, #tpu.memory_space<vmem>>, vector<1x512xf32>
    %4 = vector.shape_cast %3 : vector<1x512xf32> to vector<512xf32>
    %5 = vector.shape_cast %4 : vector<512xf32> to vector<1x512xf32>
    %6 = vector.broadcast %5 : vector<1x512xf32> to vector<8x512xf32>
    %7 = arith.addf %2, %6 : vector<8x512xf32>
    %cst_5 = arith.constant 0.000000e+00 : f32
    %8 = vector.broadcast %cst_5 : f32 to vector<8x512xf32>
    %9 = arith.maximumf %7, %8 : vector<8x512xf32>
    %10 = arith.truncf %9 : vector<8x512xf32> to vector<8x512xbf16>
    %c0_6 = arith.constant 0 : index
    %c0_7 = arith.constant 0 : index
    %11 = vector.load %arg5[%c0_6, %c0_7] : memref<512x896xbf16, #tpu.memory_space<vmem>>, vector<512x896xbf16>
    %cst_8 = arith.constant dense<0.000000e+00> : vector<8x896xf32>
    %12 = tpu.matmul %10, %11, %cst_8 {dimension_numbers = #tpu.dot_dimension_numbers<[1], [0], [0], [1], [0, 0, 1, 1], [], []>} : vector<8x512xbf16>, vector<512x896xbf16>, vector<8x896xf32> -> vector<8x896xf32>
    %c0_9 = arith.constant 0 : index
    %c0_10 = arith.constant 0 : index
    %13 = vector.load %arg6[%c0_9, %c0_10] : memref<1x896xf32, #tpu.memory_space<vmem>>, vector<1x896xf32>
    %14 = vector.shape_cast %13 : vector<1x896xf32> to vector<896xf32>
    %15 = vector.shape_cast %14 : vector<896xf32> to vector<1x896xf32>
    %16 = vector.broadcast %15 : vector<1x896xf32> to vector<8x896xf32>
    %17 = arith.addf %12, %16 : vector<8x896xf32>
    %cst_11 = arith.constant 5.000000e-01 : f32
    %18 = vector.broadcast %cst_11 : f32 to vector<8x896xf32>
    %19 = arith.mulf %18, %17 : vector<8x896xf32>
    %20 = math.tanh %19 : vector<8x896xf32>
    %cst_12 = arith.constant 5.000000e-01 : f32
    %21 = vector.broadcast %cst_12 : f32 to vector<8x896xf32>
    %22 = arith.mulf %21, %20 : vector<8x896xf32>
    %cst_13 = arith.constant 5.000000e-01 : f32
    %23 = vector.broadcast %cst_13 : f32 to vector<8x896xf32>
    %24 = arith.addf %22, %23 : vector<8x896xf32>
    %25 = arith.truncf %24 : vector<8x896xf32> to vector<8x896xbf16>
    %c0_14 = arith.constant 0 : index
    %c0_15 = arith.constant 0 : index
    %26 = vector.load %arg7[%c0_14, %c0_15] : memref<8x896xbf16, #tpu.memory_space<vmem>>, vector<8x896xbf16>
    tpu.vector_store %arg7[%c0_14, %c0_15], %25 {strides = array<i32>} : memref<8x896xbf16, #tpu.memory_space<vmem>>, vector<8x896xbf16>,
    return
  }
  func.func @transform_0(%arg0: i32, %arg1: i32) -> (i32, i32) {
    %c0_i32 = arith.constant 0 : i32
    %c0_i32_0 = arith.constant 0 : i32
    return %arg0, %c0_i32 : i32, i32
  }
  func.func @transform_1(%arg0: i32, %arg1: i32) -> (i32, i32) {
    %c0_i32 = arith.constant 0 : i32
    %c0_i32_0 = arith.constant 0 : i32
    %c0_i32_1 = arith.constant 0 : i32
    return %c0_i32, %c0_i32_0 : i32, i32
  }
  func.func @transform_2(%arg0: i32, %arg1: i32) -> (i32, i32) {
    %c0_i32 = arith.constant 0 : i32
    %c0_i32_0 = arith.constant 0 : i32
    %c0_i32_1 = arith.constant 0 : i32
    return %c0_i32, %c0_i32_0 : i32, i32
  }
  func.func @transform_3(%arg0: i32, %arg1: i32) -> (i32, i32) {
    %c0_i32 = arith.constant 0 : i32
    %c0_i32_0 = arith.constant 0 : i32
    return %c0_i32, %arg1 : i32, i32
  }
  func.func @transform_4(%arg0: i32, %arg1: i32) -> (i32, i32) {
    %c0_i32 = arith.constant 0 : i32
    %c0_i32_0 = arith.constant 0 : i32
    return %c0_i32, %arg1 : i32, i32
  }
  func.func @transform_5(%arg0: i32, %arg1: i32) -> (i32, i32) {
    %c0_i32 = arith.constant 0 : i32
    return %arg0, %arg1 : i32, i32
  }
}

</mosaic_0001>

<llo_original>
// kernel: tpu_custom_call.1
$region0: #{tpu_custom_call.1}
  #allocation0 [shape = 'u32[]', space=smem, size = 0x4, offset = 0x4, fixed_abs, tag = 'smem constant byte address 0x4 - core index']
  #allocation1 [shape = 'u32[144,128]{1,0:T(1,128)}', space=vmem, size = 0x12000, scoped, tag = 'internal scratch']
  %s0 = inlined_call_operand.hbm [shape: bf16[8,128], index: 0, kind: input, shape index: {}]
  %s1 = inlined_call_operand.hbm [shape: bf16[128,512], index: 1, kind: input, shape index: {}]
  %s2 = inlined_call_operand.vmem [shape: f32[1,512], index: 2, kind: input, shape index: {}]
  %s3 = inlined_call_operand.hbm [shape: bf16[512,896], index: 3, kind: input, shape index: {}]
  %s4 = inlined_call_operand.vmem [shape: f32[1,896], index: 4, kind: input, shape index: {}]
  %s5 = inlined_call_operand.hbm [shape: bf16[8,896], index: 5, kind: output, shape index: {}]
  %s6 = sld [smem:[#allocation0]]
  $region42: #{tpu_custom_call.1} parent=0
    _
  %s8 = ssub.s32 1, %s6
  %s9 = scalar_select 0, %s8, %s6
  $region1: #{tpu_custom_call.1} parent=0
    #allocation2 [shape = 'u8[2048]{0}', space=vmem, size = 0x800, scoped, tag = 'input window, operand 0, single buffered']
    #allocation3 [shape = 's32[1]{0}', space=sflag, size = 0x4, scoped, tag = 'scoped memory for tpu_custom_call.1']
    #allocation4 [shape = 's32[1]{0}', space=sflag, size = 0x4, scoped, tag = 'scoped memory for tpu_custom_call.1']
    #allocation5 [shape = 'u8[131072]{0}', space=vmem, size = 0x20000, scoped, tag = 'input window, operand 1, single buffered']
    #allocation6 [shape = 's32[1]{0}', space=sflag, size = 0x4, scoped, tag = 'scoped memory for tpu_custom_call.1']
    #allocation7 [shape = 'u8[917504]{0}', space=vmem, size = 0xe0000, scoped, tag = 'input window, operand 3, single buffered']
    #allocation8 [shape = 'u8[14336]{0}', space=vmem, size = 0x3800, scoped, tag = 'output window, operand 0, single buffered']
    %10 = vsyncpa [#allocation3], 0
    %11 = vsyncpa [#allocation6], 0
    %12 = vsyncpa [#allocation4], 0
    // Predicated region
    $region2: #{tpu_custom_call.1} parent=1 // pred_check
      _
    $region3: #{tpu_custom_call.1} parent=1 // pred_check_branch
      %14 = sbr.rel (0) target = $region5
    $region4: #{tpu_custom_call.1} parent=1 // pred_region
      %s16 = ssub.s32 64, 64
      %17 = vsyncadd [#allocation3], %s16
      %s19 = sshll.u32 [#allocation2], 4
      %s20 = int_to_ptr.vmem [resolvable:$true] %s19
      %22 = dma.hbm_to_vmem [thread:$0]  %s0, 64, %s20, [#allocation3]
    $region5: #{tpu_custom_call.1} parent=1 // pred_fallthru
      _
    // Predicated region
    $region6: #{tpu_custom_call.1} parent=1 // pred_check
      _
    $region7: #{tpu_custom_call.1} parent=1 // pred_check_branch
      %24 = sbr.rel (0) target = $region9
    $region8: #{tpu_custom_call.1} parent=1 // pred_region
      %s26 = ssub.s32 4096, 4096
      %27 = vsyncadd [#allocation6], %s26
      %s28 = sshll.u32 [#allocation5], 4
      %s29 = int_to_ptr.vmem [resolvable:$true] %s28
      %34 = dma.hbm_to_vmem [thread:$0]  %s1, 4096, %s29, [#allocation6], 256, 256, 16
    $region9: #{tpu_custom_call.1} parent=1 // pred_fallthru
      _
    // Predicated region
    $region10: #{tpu_custom_call.1} parent=1 // pred_check
      _
    $region11: #{tpu_custom_call.1} parent=1 // pred_check_branch
      %36 = sbr.rel (0) target = $region13
    $region12: #{tpu_custom_call.1} parent=1 // pred_region
      _
    $region13: #{tpu_custom_call.1} parent=1 // pred_fallthru
      _
    // Predicated region
    $region14: #{tpu_custom_call.1} parent=1 // pred_check
      _
    $region15: #{tpu_custom_call.1} parent=1 // pred_check_branch
      %38 = sbr.rel (0) target = $region17
    $region16: #{tpu_custom_call.1} parent=1 // pred_region
      %s40 = ssub.s32 28672, 28672
      %41 = vsyncadd [#allocation6], %s40
      %s42 = sshll.u32 [#allocation7], 4
      %s43 = int_to_ptr.vmem [resolvable:$true] %s42
      %48 = dma.hbm_to_vmem [thread:$0]  %s3, 28672, %s43, [#allocation6], 448, 448, 28
    $region17: #{tpu_custom_call.1} parent=1 // pred_fallthru
      _
    // Predicated region
    $region18: #{tpu_custom_call.1} parent=1 // pred_check
      _
    $region19: #{tpu_custom_call.1} parent=1 // pred_check_branch
      %50 = sbr.rel (0) target = $region21
    $region20: #{tpu_custom_call.1} parent=1 // pred_region
      _
    $region21: #{tpu_custom_call.1} parent=1 // pred_fallthru
      _
    // Predicated region
    $region22: #{tpu_custom_call.1} parent=1 // pred_check
      _
    $region23: #{tpu_custom_call.1} parent=1 // pred_check_branch
      %52 = sbr.rel (0) target = $region25
    $region24: #{tpu_custom_call.1} parent=1 // pred_region
      %53 = dma.done [#allocation3], 64
    $region25: #{tpu_custom_call.1} parent=1 // pred_fallthru
      _
    // Predicated region
    $region26: #{tpu_custom_call.1} parent=1 // pred_check
      _
    $region27: #{tpu_custom_call.1} parent=1 // pred_check_branch
      %55 = sbr.rel (0) target = $region29
    $region28: #{tpu_custom_call.1} parent=1 // pred_region
      %56 = dma.done [#allocation6], 4096
    $region29: #{tpu_custom_call.1} parent=1 // pred_fallthru
      _
    // Predicated region
    $region30: #{tpu_custom_call.1} parent=1 // pred_check
      _
    $region31: #{tpu_custom_call.1} parent=1 // pred_check_branch
      %58 = sbr.rel (0) target = $region33
    $region32: #{tpu_custom_call.1} parent=1 // pred_region
      %59 = dma.done [#allocation6], 28672
    $region33: #{tpu_custom_call.1} parent=1 // pred_fallthru
      _
    %v61 = vld [vmem:[#allocation2] sm:$0xf]
    %v62 = vld [vmem:[#allocation5] sm:$0xff]
    %v63 = vld [vmem:[#allocation5 + $0x8] sm:$0xff]
    %v64 = vld [vmem:[#allocation5 + $0x10] sm:$0xff]
    %v65 = vld [vmem:[#allocation5 + $0x18] sm:$0xff]
    %v66 = vld [vmem:[#allocation5 + $0x20] sm:$0xff]
    %v67 = vld [vmem:[#allocation5 + $0x28] sm:$0xff]
    %v68 = vld [vmem:[#allocation5 + $0x30] sm:$0xff]
    %v69 = vld [vmem:[#allocation5 + $0x38] sm:$0xff]
    %v70 = vld [vmem:[#allocation5 + $0x40] sm:$0xff]
    %v71 = vld [vmem:[#allocation5 + $0x48] sm:$0xff]
    %v72 = vld [vmem:[#allocation5 + $0x50] sm:$0xff]
    %v73 = vld [vmem:[#allocation5 + $0x58] sm:$0xff]
    %v74 = vld [vmem:[#allocation5 + $0x60] sm:$0xff]
    %v75 = vld [vmem:[#allocation5 + $0x68] sm:$0xff]
    %v76 = vld [vmem:[#allocation5 + $0x70] sm:$0xff]
    %v77 = vld [vmem:[#allocation5 + $0x78] sm:$0xff]
    %v78 = vld [vmem:[#allocation5 + $0x80] sm:$0xff]
    %v79 = vld [vmem:[#allocation5 + $0x88] sm:$0xff]
    %v80 = vld [vmem:[#allocation5 + $0x90] sm:$0xff]
    %v81 = vld [vmem:[#allocation5 + $0x98] sm:$0xff]
    %v82 = vld [vmem:[#allocation5 + $0xa0] sm:$0xff]
    %v83 = vld [vmem:[#allocation5 + $0xa8] sm:$0xff]
    %v84 = vld [vmem:[#allocation5 + $0xb0] sm:$0xff]
    %v85 = vld [vmem:[#allocation5 + $0xb8] sm:$0xff]
    %v86 = vld [vmem:[#allocation5 + $0xc0] sm:$0xff]
    %v87 = vld [vmem:[#allocation5 + $0xc8] sm:$0xff]
    %v88 = vld [vmem:[#allocation5 + $0xd0] sm:$0xff]
    %v89 = vld [vmem:[#allocation5 + $0xd8] sm:$0xff]
    %v90 = vld [vmem:[#allocation5 + $0xe0] sm:$0xff]
    %v91 = vld [vmem:[#allocation5 + $0xe8] sm:$0xff]
    %v92 = vld [vmem:[#allocation5 + $0xf0] sm:$0xff]
    %v93 = vld [vmem:[#allocation5 + $0xf8] sm:$0xff]
    %v94 = vld [vmem:[%s2] sm:$0xf]
    %v96 = vlaneseq
    %v97 = vshrl.u32 %v96, 7
    %v98 = vsub.s32 0, %v97
    %v99 = vrot.slane %v94, %v98
    %v100 = vlaneseq
    %v101 = vshrl.u32 %v100, 7
    %v102 = vsub.s32 1, %v101
    %v103 = vrot.slane %v94, %v102
    %v104 = vlaneseq
    %v105 = vshrl.u32 %v104, 7
    %v106 = vsub.s32 2, %v105
    %v107 = vrot.slane %v94, %v106
    %v108 = vlaneseq
    %v109 = vshrl.u32 %v108, 7
    %v110 = vsub.s32 3, %v109
    %v111 = vrot.slane %v94, %v110
    %v148 = vunpack.c.l.b16 %v62
    %v149 = vunpack.c.h.b16 %v62
    %v150 = vunpack.c.l.b16 %v63
    %v151 = vunpack.c.h.b16 %v63
    %v152 = vunpack.c.l.b16 %v64
    %v153 = vunpack.c.h.b16 %v64
    %v154 = vunpack.c.l.b16 %v65
    %v155 = vunpack.c.h.b16 %v65
    %v156 = vunpack.c.l.b16 %v66
    %v157 = vunpack.c.h.b16 %v66
    %v158 = vunpack.c.l.b16 %v67
    %v159 = vunpack.c.h.b16 %v67
    %v160 = vunpack.c.l.b16 %v68
    %v161 = vunpack.c.h.b16 %v68
    %v162 = vunpack.c.l.b16 %v69
    %v163 = vunpack.c.h.b16 %v69
    %v164 = vunpack.c.l.b16 %v70
    %v165 = vunpack.c.h.b16 %v70
    %v166 = vunpack.c.l.b16 %v71
    %v167 = vunpack.c.h.b16 %v71
    %v168 = vunpack.c.l.b16 %v72
    %v169 = vunpack.c.h.b16 %v72
    %v170 = vunpack.c.l.b16 %v73
    %v171 = vunpack.c.h.b16 %v73
    %v172 = vunpack.c.l.b16 %v74
    %v173 = vunpack.c.h.b16 %v74
    %v174 = vunpack.c.l.b16 %v75
    %v175 = vunpack.c.h.b16 %v75
    %v176 = vunpack.c.l.b16 %v76
    %v177 = vunpack.c.h.b16 %v76
    %v178 = vunpack.c.l.b16 %v77
    %v179 = vunpack.c.h.b16 %v77
    %v180 = vunpack.c.l.b16 %v78
    %v181 = vunpack.c.h.b16 %v78
    %v182 = vunpack.c.l.b16 %v79
    %v183 = vunpack.c.h.b16 %v79
    %v184 = vunpack.c.l.b16 %v80
    %v185 = vunpack.c.h.b16 %v80
    %v186 = vunpack.c.l.b16 %v81
    %v187 = vunpack.c.h.b16 %v81
    %v188 = vunpack.c.l.b16 %v82
    %v189 = vunpack.c.h.b16 %v82
    %v190 = vunpack.c.l.b16 %v83
    %v191 = vunpack.c.h.b16 %v83
    %v192 = vunpack.c.l.b16 %v84
    %v193 = vunpack.c.h.b16 %v84
    %v194 = vunpack.c.l.b16 %v85
    %v195 = vunpack.c.h.b16 %v85
    %v196 = vunpack.c.l.b16 %v86
    %v197 = vunpack.c.h.b16 %v86
    %v198 = vunpack.c.l.b16 %v87
    %v199 = vunpack.c.h.b16 %v87
    %v200 = vunpack.c.l.b16 %v88
    %v201 = vunpack.c.h.b16 %v88
    %v202 = vunpack.c.l.b16 %v89
    %v203 = vunpack.c.h.b16 %v89
    %v204 = vunpack.c.l.b16 %v90
    %v205 = vunpack.c.h.b16 %v90
    %v206 = vunpack.c.l.b16 %v91
    %v207 = vunpack.c.h.b16 %v91
    %v208 = vunpack.c.l.b16 %v92
    %v209 = vunpack.c.h.b16 %v92
    %v210 = vunpack.c.l.b16 %v93
    %v211 = vunpack.c.h.b16 %v93
    %v212 = vpack.c.b16 %v152, %v148
    %v213 = vpack.c.b16 %v153, %v149
    %v214 = vpack.c.b16 %v154, %v150
    %v215 = vpack.c.b16 %v155, %v151
    %v216 = vpack.c.b16 %v160, %v156
    %v217 = vpack.c.b16 %v161, %v157
    %v218 = vpack.c.b16 %v162, %v158
    %v219 = vpack.c.b16 %v163, %v159
    %v220 = vpack.c.b16 %v168, %v164
    %v221 = vpack.c.b16 %v169, %v165
    %v222 = vpack.c.b16 %v170, %v166
    %v223 = vpack.c.b16 %v171, %v167
    %v224 = vpack.c.b16 %v176, %v172
    %v225 = vpack.c.b16 %v177, %v173
    %v226 = vpack.c.b16 %v178, %v174
    %v227 = vpack.c.b16 %v179, %v175
    %v228 = vpack.c.b16 %v184, %v180
    %v229 = vpack.c.b16 %v185, %v181
    %v230 = vpack.c.b16 %v186, %v182
    %v231 = vpack.c.b16 %v187, %v183
    %v232 = vpack.c.b16 %v192, %v188
    %v233 = vpack.c.b16 %v193, %v189
    %v234 = vpack.c.b16 %v194, %v190
    %v235 = vpack.c.b16 %v195, %v191
    %v236 = vpack.c.b16 %v200, %v196
    %v237 = vpack.c.b16 %v201, %v197
    %v238 = vpack.c.b16 %v202, %v198
    %v239 = vpack.c.b16 %v203, %v199
    %v240 = vpack.c.b16 %v208, %v204
    %v241 = vpack.c.b16 %v209, %v205
    %v242 = vpack.c.b16 %v210, %v206
    %v243 = vpack.c.b16 %v211, %v207
    %276 = vmatprep.subr.bf16.mxu0 %v213
    %277 = vmatpush1.bf16.msra.mxu0 %v212
    %278 = vmatprep.subr.bf16.mxu0 %v217
    %279 = vmatpush1.bf16.msra.mxu0 %v216
    %280 = vmatprep.subr.bf16.mxu0 %v221
    %281 = vmatpush1.bf16.msra.mxu0 %v220
    %282 = vmatprep.subr.bf16.mxu0 %v225
    %283 = vmatpush1.bf16.msra.mxu0 %v224
    %284 = vmatprep.subr.bf16.mxu0 %v229
    %285 = vmatpush1.bf16.msra.mxu0 %v228
    %286 = vmatprep.subr.bf16.mxu0 %v233
    %287 = vmatpush1.bf16.msra.mxu0 %v232
    %288 = vmatprep.subr.bf16.mxu0 %v237
    %289 = vmatpush1.bf16.msra.mxu0 %v236
    %290 = vmatprep.subr.bf16.mxu0 %v241
    %291 = vmatpush1.bf16.msra.mxu0 %v240
    %292 = vmatprep.subr.bf16.mxu0 0
    %293 = vmatpush1.bf16.msra.mxu0 0
    %294 = vmatprep.subr.bf16.mxu0 0
    %295 = vmatpush1.bf16.msra.mxu0 0
    %296 = vmatprep.subr.bf16.mxu0 0
    %297 = vmatpush1.bf16.msra.mxu0 0
    %298 = vmatprep.subr.bf16.mxu0 0
    %299 = vmatpush1.bf16.msra.mxu0 0
    %300 = vmatprep.subr.bf16.mxu0 0
    %301 = vmatpush1.bf16.msra.mxu0 0
    %302 = vmatprep.subr.bf16.mxu0 0
    %303 = vmatpush1.bf16.msra.mxu0 0
    %304 = vmatprep.subr.bf16.mxu0 0
    %305 = vmatpush1.bf16.msra.mxu0 0
    %306 = vmatprep.subr.bf16.mxu0 0
    %307 = vmatpush1.bf16.msra.mxu0 0
    %308 = vmatprep.mubr.bf16.mxu0 0
    %309 = vmatmul.mubr.bf16.gmra.mrb[0].mxu0 %v61
    %v310 = vpop.f32.mrb[0].mxu0
    %v311 = vadd.f32 %v99, %v310
    %v312 = vpop.f32.mrb[0].mxu0
    %v313 = vadd.f32 %v103, %v312
    %v314 = vpop.f32.mrb[0].mxu0
    %v315 = vpop.f32.mrb[0].mxu0
    %316 = vdwg.mxu0
    %317 = vmatprep.subr.bf16.mxu0 %v215
    %318 = vmatpush1.bf16.msra.mxu0 %v214
    %319 = vmatprep.subr.bf16.mxu0 %v219
    %320 = vmatpush1.bf16.msra.mxu0 %v218
    %321 = vmatprep.subr.bf16.mxu0 %v223
    %322 = vmatpush1.bf16.msra.mxu0 %v222
    %323 = vmatprep.subr.bf16.mxu0 %v227
    %324 = vmatpush1.bf16.msra.mxu0 %v226
    %325 = vmatprep.subr.bf16.mxu0 %v231
    %326 = vmatpush1.bf16.msra.mxu0 %v230
    %327 = vmatprep.subr.bf16.mxu0 %v235
    %328 = vmatpush1.bf16.msra.mxu0 %v234
    %329 = vmatprep.subr.bf16.mxu0 %v239
    %330 = vmatpush1.bf16.msra.mxu0 %v238
    %331 = vmatprep.subr.bf16.mxu0 %v243
    %332 = vmatpush1.bf16.msra.mxu0 %v242
    %333 = vmatprep.subr.bf16.mxu0 0
    %334 = vmatpush1.bf16.msra.mxu0 0
    %335 = vmatprep.subr.bf16.mxu0 0
    %336 = vmatpush1.bf16.msra.mxu0 0
    %337 = vmatprep.subr.bf16.mxu0 0
    %338 = vmatpush1.bf16.msra.mxu0 0
    %339 = vmatprep.subr.bf16.mxu0 0
    %340 = vmatpush1.bf16.msra.mxu0 0
    %341 = vmatprep.subr.bf16.mxu0 0
    %342 = vmatpush1.bf16.msra.mxu0 0
    %343 = vmatprep.subr.bf16.mxu0 0
    %344 = vmatpush1.bf16.msra.mxu0 0
    %345 = vmatprep.subr.bf16.mxu0 0
    %346 = vmatpush1.bf16.msra.mxu0 0
    %347 = vmatprep.subr.bf16.mxu0 0
    %348 = vmatpush1.bf16.msra.mxu0 0
    %349 = vmatprep.mubr.bf16.mxu0 0
    %350 = vmatmul.mubr.bf16.gmra.mrb[0].mxu0 %v61
    %v351 = vpop.f32.mrb[0].mxu0
    %v352 = vadd.f32 %v107, %v351
    %v353 = vpop.f32.mrb[0].mxu0
    %v354 = vadd.f32 %v111, %v353
    %v355 = vpop.f32.mrb[0].mxu0
    %v356 = vpop.f32.mrb[0].mxu0
    %357 = vdwg.mxu0
    %v358 = vmax.f32 %v311, 0.0
    %v359 = vmax.f32 %v313, 0.0
    %v360 = vmax.f32 %v352, 0.0
    %v361 = vmax.f32 %v354, 0.0
    %v362 = vpack.c.bf16 %v358, %v358
    %v363 = vpack.c.bf16 %v359, %v359
    %v364 = vpack.c.bf16 %v360, %v360
    %v365 = vpack.c.bf16 %v361, %v361
    %v366 = vld [vmem:[#allocation7] sm:$0xff]
    %v367 = vld [vmem:[#allocation7 + $0x8] sm:$0xff]
    %v368 = vld [vmem:[#allocation7 + $0x10] sm:$0xff]
    %v369 = vld [vmem:[#allocation7 + $0x18] sm:$0xf]
    %v370 = vld [vmem:[#allocation7 + $0x1c] sm:$0xff]
    %v371 = vld [vmem:[#allocation7 + $0x24] sm:$0xff]
    %v372 = vld [vmem:[#allocation7 + $0x2c] sm:$0xff]
    %v373 = vld [vmem:[#allocation7 + $0x34] sm:$0xf]
    %v374 = vld [vmem:[#allocation7 + $0x38] sm:$0xff]
    %v375 = vld [vmem:[#allocation7 + $0x40] sm:$0xff]
    %v376 = vld [vmem:[#allocation7 + $0x48] sm:$0xff]
    %v377 = vld [vmem:[#allocation7 + $0x50] sm:$0xf]
    %v378 = vld [vmem:[#allocation7 + $0x54] sm:$0xff]
    %v379 = vld [vmem:[#allocation7 + $0x5c] sm:$0xff]
    %v380 = vld [vmem:[#allocation7 + $0x64] sm:$0xff]
    %v381 = vld [vmem:[#allocation7 + $0x6c] sm:$0xf]
    %v382 = vld [vmem:[#allocation7 + $0x70] sm:$0xff]
    %v383 = vld [vmem:[#allocation7 + $0x78] sm:$0xff]
    %v384 = vld [vmem:[#allocation7 + $0x80] sm:$0xff]
    %v385 = vld [vmem:[#allocation7 + $0x88] sm:$0xf]
    %v386 = vld [vmem:[#allocation7 + $0x8c] sm:$0xff]
    %v387 = vld [vmem:[#allocation7 + $0x94] sm:$0xff]
    %v388 = vld [vmem:[#allocation7 + $0x9c] sm:$0xff]
    %v389 = vld [vmem:[#allocation7 + $0xa4] sm:$0xf]
    %v390 = vld [vmem:[#allocation7 + $0xa8] sm:$0xff]
    %v391 = vld [vmem:[#allocation7 + $0xb0] sm:$0xff]
    %v392 = vld [vmem:[#allocation7 + $0xb8] sm:$0xff]
    %v393 = vld [vmem:[#allocation7 + $0xc0] sm:$0xf]
    %v394 = vld [vmem:[#allocation7 + $0xc4] sm:$0xff]
    %v395 = vld [vmem:[#allocation7 + $0xcc] sm:$0xff]
    %v396 = vld [vmem:[#allocation7 + $0xd4] sm:$0xff]
    %v397 = vld [vmem:[#allocation7 + $0xdc] sm:$0xf]
    %v398 = vld [vmem:[#allocation7 + $0xe0] sm:$0xff]
    %v399 = vld [vmem:[#allocation7 + $0xe8] sm:$0xff]
    %v400 = vld [vmem:[#allocation7 + $0xf0] sm:$0xff]
    %v401 = vld [vmem:[#allocation7 + $0xf8] sm:$0xf]
    %v402 = vld [vmem:[#allocation7 + $0xfc] sm:$0xff]
    %v403 = vld [vmem:[#allocation7 + $0x104] sm:$0xff]
    %v404 = vld [vmem:[#allocation7 + $0x10c] sm:$0xff]
    %v405 = vld [vmem:[#allocation7 + $0x114] sm:$0xf]
    %v406 = vld [vmem:[#allocation7 + $0x118] sm:$0xff]
    %v407 = vld [vmem:[#allocation7 + $0x120] sm:$0xff]
    %v408 = vld [vmem:[#allocation7 + $0x128] sm:$0xff]
    %v409 = vld [vmem:[#allocation7 + $0x130] sm:$0xf]
    %v410 = vld [vmem:[#allocation7 + $0x134] sm:$0xff]
    %v411 = vld [vmem:[#allocation7 + $0x13c] sm:$0xff]
    %v412 = vld [vmem:[#allocation7 + $0x144] sm:$0xff]
    %v413 = vld [vmem:[#allocation7 + $0x14c] sm:$0xf]
    %v414 = vld [vmem:[#allocation7 + $0x150] sm:$0xff]
    %v415 = vld [vmem:[#allocation7 + $0x158] sm:$0xff]
    %v416 = vld [vmem:[#allocation7 + $0x160] sm:$0xff]
    %v417 = vld [vmem:[#allocation7 + $0x168] sm:$0xf]
    %v418 = vld [vmem:[#allocation7 + $0x16c] sm:$0xff]
    %v419 = vld [vmem:[#allocation7 + $0x174] sm:$0xff]
    %v420 = vld [vmem:[#allocation7 + $0x17c] sm:$0xff]
    %v421 = vld [vmem:[#allocation7 + $0x184] sm:$0xf]
    %v422 = vld [vmem:[#allocation7 + $0x188] sm:$0xff]
    %v423 = vld [vmem:[#allocation7 + $0x190] sm:$0xff]
    %v424 = vld [vmem:[#allocation7 + $0x198] sm:$0xff]
    %v425 = vld [vmem:[#allocation7 + $0x1a0] sm:$0xf]
    %v426 = vld [vmem:[#allocation7 + $0x1a4] sm:$0xff]
    %v427 = vld [vmem:[#allocation7 + $0x1ac] sm:$0xff]
    %v428 = vld [vmem:[#allocation7 + $0x1b4] sm:$0xff]
    %v429 = vld [vmem:[#allocation7 + $0x1bc] sm:$0xf]
    %v430 = vld [vmem:[#allocation7 + $0x1c0] sm:$0xff]
    %v431 = vld [vmem:[#allocation7 + $0x1c8] sm:$0xff]
    %v432 = vld [vmem:[#allocation7 + $0x1d0] sm:$0xff]
    %v433 = vld [vmem:[#allocation7 + $0x1d8] sm:$0xf]
    %v434 = vld [vmem:[#allocation7 + $0x1dc] sm:$0xff]
    %v435 = vld [vmem:[#allocation7 + $0x1e4] sm:$0xff]
    %v436 = vld [vmem:[#allocation7 + $0x1ec] sm:$0xff]
    %v437 = vld [vmem:[#allocation7 + $0x1f4] sm:$0xf]
    %v438 = vld [vmem:[#allocation7 + $0x1f8] sm:$0xff]
    %v439 = vld [vmem:[#allocation7 + $0x200] sm:$0xff]
    %v440 = vld [vmem:[#allocation7 + $0x208] sm:$0xff]
    %v441 = vld [vmem:[#allocation7 + $0x210] sm:$0xf]
    %v442 = vld [vmem:[#allocation7 + $0x214] sm:$0xff]
    %v443 = vld [vmem:[#allocation7 + $0x21c] sm:$0xff]
    %v444 = vld [vmem:[#allocation7 + $0x224] sm:$0xff]
    %v445 = vld [vmem:[#allocation7 + $0x22c] sm:$0xf]
    %v446 = vld [vmem:[#allocation7 + $0x230] sm:$0xff]
    %v447 = vld [vmem:[#allocation7 + $0x238] sm:$0xff]
    %v448 = vld [vmem:[#allocation7 + $0x240] sm:$0xff]
    %v449 = vld [vmem:[#allocation7 + $0x248] sm:$0xf]
    %v450 = vld [vmem:[#allocation7 + $0x24c] sm:$0xff]
    %v451 = vld [vmem:[#allocation7 + $0x254] sm:$0xff]
    %v452 = vld [vmem:[#allocation7 + $0x25c] sm:$0xff]
    %v453 = vld [vmem:[#allocation7 + $0x264] sm:$0xf]
    %v454 = vld [vmem:[#allocation7 + $0x268] sm:$0xff]
    %v455 = vld [vmem:[#allocation7 + $0x270] sm:$0xff]
    %v456 = vld [vmem:[#allocation7 + $0x278] sm:$0xff]
    %v457 = vld [vmem:[#allocation7 + $0x280] sm:$0xf]
    %v458 = vld [vmem:[#allocation7 + $0x284] sm:$0xff]
    %v459 = vld [vmem:[#allocation7 + $0x28c] sm:$0xff]
    %v460 = vld [vmem:[#allocation7 + $0x294] sm:$0xff]
    %v461 = vld [vmem:[#allocation7 + $0x29c] sm:$0xf]
    %v462 = vld [vmem:[#allocation7 + $0x2a0] sm:$0xff]
    %v463 = vld [vmem:[#allocation7 + $0x2a8] sm:$0xff]
    %v464 = vld [vmem:[#allocation7 + $0x2b0] sm:$0xff]
    %v465 = vld [vmem:[#allocation7 + $0x2b8] sm:$0xf]
    %v466 = vld [vmem:[#allocation7 + $0x2bc] sm:$0xff]
    %v467 = vld [vmem:[#allocation7 + $0x2c4] sm:$0xff]
    %v468 = vld [vmem:[#allocation7 + $0x2cc] sm:$0xff]
    %v469 = vld [vmem:[#allocation7 + $0x2d4] sm:$0xf]
    %v470 = vld [vmem:[#allocation7 + $0x2d8] sm:$0xff]
    %v471 = vld [vmem:[#allocation7 + $0x2e0] sm:$0xff]
    %v472 = vld [vmem:[#allocation7 + $0x2e8] sm:$0xff]
    %v473 = vld [vmem:[#allocation7 + $0x2f0] sm:$0xf]
    %v474 = vld [vmem:[#allocation7 + $0x2f4] sm:$0xff]
    %v475 = vld [vmem:[#allocation7 + $0x2fc] sm:$0xff]
    %v476 = vld [vmem:[#allocation7 + $0x304] sm:$0xff]
    %v477 = vld [vmem:[#allocation7 + $0x30c] sm:$0xf]
    %v478 = vld [vmem:[#allocation7 + $0x310] sm:$0xff]
    %v479 = vld [vmem:[#allocation7 + $0x318] sm:$0xff]
    %v480 = vld [vmem:[#allocation7 + $0x320] sm:$0xff]
    %v481 = vld [vmem:[#allocation7 + $0x328] sm:$0xf]
    %v482 = vld [vmem:[#allocation7 + $0x32c] sm:$0xff]
    %v483 = vld [vmem:[#allocation7 + $0x334] sm:$0xff]
    %v484 = vld [vmem:[#allocation7 + $0x33c] sm:$0xff]
    %v485 = vld [vmem:[#allocation7 + $0x344] sm:$0xf]
    %v486 = vld [vmem:[#allocation7 + $0x348] sm:$0xff]
    %v487 = vld [vmem:[#allocation7 + $0x350] sm:$0xff]
    %v488 = vld [vmem:[#allocation7 + $0x358] sm:$0xff]
    %v489 = vld [vmem:[#allocation7 + $0x360] sm:$0xf]
    %v490 = vld [vmem:[#allocation7 + $0x364] sm:$0xff]
    %v491 = vld [vmem:[#allocation7 + $0x36c] sm:$0xff]
    %v492 = vld [vmem:[#allocation7 + $0x374] sm:$0xff]
    %v493 = vld [vmem:[#allocation7 + $0x37c] sm:$0xf]
    %v494 = vld [vmem:[#allocation7 + $0x380] sm:$0xff]
    %v495 = vld [vmem:[#allocation7 + $0x388] sm:$0xff]
    %v496 = vld [vmem:[#allocation7 + $0x390] sm:$0xff]
    %v497 = vld [vmem:[#allocation7 + $0x398] sm:$0xf]
    %v498 = vld [vmem:[#allocation7 + $0x39c] sm:$0xff]
    %v499 = vld [vmem:[#allocation7 + $0x3a4] sm:$0xff]
    %v500 = vld [vmem:[#allocation7 + $0x3ac] sm:$0xff]
    %v501 = vld [vmem:[#allocation7 + $0x3b4] sm:$0xf]
    %v502 = vld [vmem:[#allocation7 + $0x3b8] sm:$0xff]
    %v503 = vld [vmem:[#allocation7 + $0x3c0] sm:$0xff]
    %v504 = vld [vmem:[#allocation7 + $0x3c8] sm:$0xff]
    %v505 = vld [vmem:[#allocation7 + $0x3d0] sm:$0xf]
    %v506 = vld [vmem:[#allocation7 + $0x3d4] sm:$0xff]
    %v507 = vld [vmem:[#allocation7 + $0x3dc] sm:$0xff]
    %v508 = vld [vmem:[#allocation7 + $0x3e4] sm:$0xff]
    %v509 = vld [vmem:[#allocation7 + $0x3ec] sm:$0xf]
    %v510 = vld [vmem:[#allocation7 + $0x3f0] sm:$0xff]
    %v511 = vld [vmem:[#allocation7 + $0x3f8] sm:$0xff]
    %v512 = vld [vmem:[#allocation7 + $0x400] sm:$0xff]
    %v513 = vld [vmem:[#allocation7 + $0x408] sm:$0xf]
    %v514 = vld [vmem:[#allocation7 + $0x40c] sm:$0xff]
    %v515 = vld [vmem:[#allocation7 + $0x414] sm:$0xff]
    %v516 = vld [vmem:[#allocation7 + $0x41c] sm:$0xff]
    %v517 = vld [vmem:[#allocation7 + $0x424] sm:$0xf]
    %v518 = vld [vmem:[#allocation7 + $0x428] sm:$0xff]
    %v519 = vld [vmem:[#allocation7 + $0x430] sm:$0xff]
    %v520 = vld [vmem:[#allocation7 + $0x438] sm:$0xff]
    %v521 = vld [vmem:[#allocation7 + $0x440] sm:$0xf]
    %v522 = vld [vmem:[#allocation7 + $0x444] sm:$0xff]
    %v523 = vld [vmem:[#allocation7 + $0x44c] sm:$0xff]
    %v524 = vld [vmem:[#allocation7 + $0x454] sm:$0xff]
    %v525 = vld [vmem:[#allocation7 + $0x45c] sm:$0xf]
    %v526 = vld [vmem:[#allocation7 + $0x460] sm:$0xff]
    %v527 = vld [vmem:[#allocation7 + $0x468] sm:$0xff]
    %v528 = vld [vmem:[#allocation7 + $0x470] sm:$0xff]
    %v529 = vld [vmem:[#allocation7 + $0x478] sm:$0xf]
    %v530 = vld [vmem:[#allocation7 + $0x47c] sm:$0xff]
    %v531 = vld [vmem:[#allocation7 + $0x484] sm:$0xff]
    %v532 = vld [vmem:[#allocation7 + $0x48c] sm:$0xff]
    %v533 = vld [vmem:[#allocation7 + $0x494] sm:$0xf]
    %v534 = vld [vmem:[#allocation7 + $0x498] sm:$0xff]
    %v535 = vld [vmem:[#allocation7 + $0x4a0] sm:$0xff]
    %v536 = vld [vmem:[#allocation7 + $0x4a8] sm:$0xff]
    %v537 = vld [vmem:[#allocation7 + $0x4b0] sm:$0xf]
    %v538 = vld [vmem:[#allocation7 + $0x4b4] sm:$0xff]
    %v539 = vld [vmem:[#allocation7 + $0x4bc] sm:$0xff]
    %v540 = vld [vmem:[#allocation7 + $0x4c4] sm:$0xff]
    %v541 = vld [vmem:[#allocation7 + $0x4cc] sm:$0xf]
    %v542 = vld [vmem:[#allocation7 + $0x4d0] sm:$0xff]
    %v543 = vld [vmem:[#allocation7 + $0x4d8] sm:$0xff]
    %v544 = vld [vmem:[#allocation7 + $0x4e0] sm:$0xff]
    %v545 = vld [vmem:[#allocation7 + $0x4e8] sm:$0xf]
    %v546 = vld [vmem:[#allocation7 + $0x4ec] sm:$0xff]
    %v547 = vld [vmem:[#allocation7 + $0x4f4] sm:$0xff]
    %v548 = vld [vmem:[#allocation7 + $0x4fc] sm:$0xff]
    %v549 = vld [vmem:[#allocation7 + $0x504] sm:$0xf]
    %v550 = vld [vmem:[#allocation7 + $0x508] sm:$0xff]
    %v551 = vld [vmem:[#allocation7 + $0x510] sm:$0xff]
    %v552 = vld [vmem:[#allocation7 + $0x518] sm:$0xff]
    %v553 = vld [vmem:[#allocation7 + $0x520] sm:$0xf]
    %v554 = vld [vmem:[#allocation7 + $0x524] sm:$0xff]
    %v555 = vld [vmem:[#allocation7 + $0x52c] sm:$0xff]
    %v556 = vld [vmem:[#allocation7 + $0x534] sm:$0xff]
    %v557 = vld [vmem:[#allocation7 + $0x53c] sm:$0xf]
    %v558 = vld [vmem:[#allocation7 + $0x540] sm:$0xff]
    %v559 = vld [vmem:[#allocation7 + $0x548] sm:$0xff]
    %v560 = vld [vmem:[#allocation7 + $0x550] sm:$0xff]
    %v561 = vld [vmem:[#allocation7 + $0x558] sm:$0xf]
    %v562 = vld [vmem:[#allocation7 + $0x55c] sm:$0xff]
    %v563 = vld [vmem:[#allocation7 + $0x564] sm:$0xff]
    %v564 = vld [vmem:[#allocation7 + $0x56c] sm:$0xff]
    %v565 = vld [vmem:[#allocation7 + $0x574] sm:$0xf]
    %v566 = vld [vmem:[#allocation7 + $0x578] sm:$0xff]
    %v567 = vld [vmem:[#allocation7 + $0x580] sm:$0xff]
    %v568 = vld [vmem:[#allocation7 + $0x588] sm:$0xff]
    %v569 = vld [vmem:[#allocation7 + $0x590] sm:$0xf]
    %v570 = vld [vmem:[#allocation7 + $0x594] sm:$0xff]
    %v571 = vld [vmem:[#allocation7 + $0x59c] sm:$0xff]
    %v572 = vld [vmem:[#allocation7 + $0x5a4] sm:$0xff]
    %v573 = vld [vmem:[#allocation7 + $0x5ac] sm:$0xf]
    %v574 = vld [vmem:[#allocation7 + $0x5b0] sm:$0xff]
    %v575 = vld [vmem:[#allocation7 + $0x5b8] sm:$0xff]
    %v576 = vld [vmem:[#allocation7 + $0x5c0] sm:$0xff]
    %v577 = vld [vmem:[#allocation7 + $0x5c8] sm:$0xf]
    %v578 = vld [vmem:[#allocation7 + $0x5cc] sm:$0xff]
    %v579 = vld [vmem:[#allocation7 + $0x5d4] sm:$0xff]
    %v580 = vld [vmem:[#allocation7 + $0x5dc] sm:$0xff]
    %v581 = vld [vmem:[#allocation7 + $0x5e4] sm:$0xf]
    %v582 = vld [vmem:[#allocation7 + $0x5e8] sm:$0xff]
    %v583 = vld [vmem:[#allocation7 + $0x5f0] sm:$0xff]
    %v584 = vld [vmem:[#allocation7 + $0x5f8] sm:$0xff]
    %v585 = vld [vmem:[#allocation7 + $0x600] sm:$0xf]
    %v586 = vld [vmem:[#allocation7 + $0x604] sm:$0xff]
    %v587 = vld [vmem:[#allocation7 + $0x60c] sm:$0xff]
    %v588 = vld [vmem:[#allocation7 + $0x614] sm:$0xff]
    %v589 = vld [vmem:[#allocation7 + $0x61c] sm:$0xf]
    %v590 = vld [vmem:[#allocation7 + $0x620] sm:$0xff]
    %v591 = vld [vmem:[#allocation7 + $0x628] sm:$0xff]
    %v592 = vld [vmem:[#allocation7 + $0x630] sm:$0xff]
    %v593 = vld [vmem:[#allocation7 + $0x638] sm:$0xf]
    %v594 = vld [vmem:[#allocation7 + $0x63c] sm:$0xff]
    %v595 = vld [vmem:[#allocation7 + $0x644] sm:$0xff]
    %v596 = vld [vmem:[#allocation7 + $0x64c] sm:$0xff]
    %v597 = vld [vmem:[#allocation7 + $0x654] sm:$0xf]
    %v598 = vld [vmem:[#allocation7 + $0x658] sm:$0xff]
    %v599 = vld [vmem:[#allocation7 + $0x660] sm:$0xff]
    %v600 = vld [vmem:[#allocation7 + $0x668] sm:$0xff]
    %v601 = vld [vmem:[#allocation7 + $0x670] sm:$0xf]
    %v602 = vld [vmem:[#allocation7 + $0x674] sm:$0xff]
    %v603 = vld [vmem:[#allocation7 + $0x67c] sm:$0xff]
    %v604 = vld [vmem:[#allocation7 + $0x684] sm:$0xff]
    %v605 = vld [vmem:[#allocation7 + $0x68c] sm:$0xf]
    %v606 = vld [vmem:[#allocation7 + $0x690] sm:$0xff]
    %v607 = vld [vmem:[#allocation7 + $0x698] sm:$0xff]
    %v608 = vld [vmem:[#allocation7 + $0x6a0] sm:$0xff]
    %v609 = vld [vmem:[#allocation7 + $0x6a8] sm:$0xf]
    %v610 = vld [vmem:[#allocation7 + $0x6ac] sm:$0xff]
    %v611 = vld [vmem:[#allocation7 + $0x6b4] sm:$0xff]
    %v612 = vld [vmem:[#allocation7 + $0x6bc] sm:$0xff]
    %v613 = vld [vmem:[#allocation7 + $0x6c4] sm:$0xf]
    %v614 = vld [vmem:[#allocation7 + $0x6c8] sm:$0xff]
    %v615 = vld [vmem:[#allocation7 + $0x6d0] sm:$0xff]
    %v616 = vld [vmem:[#allocation7 + $0x6d8] sm:$0xff]
    %v617 = vld [vmem:[#allocation7 + $0x6e0] sm:$0xf]
    %v618 = vld [vmem:[#allocation7 + $0x6e4] sm:$0xff]
    %v619 = vld [vmem:[#allocation7 + $0x6ec] sm:$0xff]
    %v620 = vld [vmem:[#allocation7 + $0x6f4] sm:$0xff]
    %v621 = vld [vmem:[#allocation7 + $0x6fc] sm:$0xf]
    %v622 = vld [vmem:[%s4] sm:$0xff]
    %v624 = vlaneseq
    %v625 = vshrl.u32 %v624, 7
    %v626 = vsub.s32 0, %v625
    %v627 = vrot.slane %v622, %v626
    %v628 = vlaneseq
    %v629 = vshrl.u32 %v628, 7
    %v630 = vsub.s32 1, %v629
    %v631 = vrot.slane %v622, %v630
    %v632 = vlaneseq
    %v633 = vshrl.u32 %v632, 7
    %v634 = vsub.s32 2, %v633
    %v635 = vrot.slane %v622, %v634
    %v636 = vlaneseq
    %v637 = vshrl.u32 %v636, 7
    %v638 = vsub.s32 3, %v637
    %v639 = vrot.slane %v622, %v638
    %v640 = vlaneseq
    %v641 = vshrl.u32 %v640, 7
    %v642 = vsub.s32 4, %v641
    %v643 = vrot.slane %v622, %v642
    %v644 = vlaneseq
    %v645 = vshrl.u32 %v644, 7
    %v646 = vsub.s32 5, %v645
    %v647 = vrot.slane %v622, %v646
    %v648 = vlaneseq
    %v649 = vshrl.u32 %v648, 7
    %v650 = vsub.s32 6, %v649
    %v651 = vrot.slane %v622, %v650
    %v915 = vunpack.c.l.b16 %v366
    %v916 = vunpack.c.h.b16 %v366
    %v917 = vunpack.c.l.b16 %v367
    %v918 = vunpack.c.h.b16 %v367
    %v919 = vunpack.c.l.b16 %v368
    %v920 = vunpack.c.h.b16 %v368
    %v921 = vunpack.c.l.b16 %v369
    %v922 = vunpack.c.l.b16 %v370
    %v923 = vunpack.c.h.b16 %v370
    %v924 = vunpack.c.l.b16 %v371
    %v925 = vunpack.c.h.b16 %v371
    %v926 = vunpack.c.l.b16 %v372
    %v927 = vunpack.c.h.b16 %v372
    %v928 = vunpack.c.l.b16 %v373
    %v929 = vunpack.c.l.b16 %v374
    %v930 = vunpack.c.h.b16 %v374
    %v931 = vunpack.c.l.b16 %v375
    %v932 = vunpack.c.h.b16 %v375
    %v933 = vunpack.c.l.b16 %v376
    %v934 = vunpack.c.h.b16 %v376
    %v935 = vunpack.c.l.b16 %v377
    %v936 = vunpack.c.l.b16 %v378
    %v937 = vunpack.c.h.b16 %v378
    %v938 = vunpack.c.l.b16 %v379
    %v939 = vunpack.c.h.b16 %v379
    %v940 = vunpack.c.l.b16 %v380
    %v941 = vunpack.c.h.b16 %v380
    %v942 = vunpack.c.l.b16 %v381
    %v943 = vunpack.c.l.b16 %v382
    %v944 = vunpack.c.h.b16 %v382
    %v945 = vunpack.c.l.b16 %v383
    %v946 = vunpack.c.h.b16 %v383
    %v947 = vunpack.c.l.b16 %v384
    %v948 = vunpack.c.h.b16 %v384
    %v949 = vunpack.c.l.b16 %v385
    %v950 = vunpack.c.l.b16 %v386
    %v951 = vunpack.c.h.b16 %v386
    %v952 = vunpack.c.l.b16 %v387
    %v953 = vunpack.c.h.b16 %v387
    %v954 = vunpack.c.l.b16 %v388
    %v955 = vunpack.c.h.b16 %v388
    %v956 = vunpack.c.l.b16 %v389
    %v957 = vunpack.c.l.b16 %v390
    %v958 = vunpack.c.h.b16 %v390
    %v959 = vunpack.c.l.b16 %v391
    %v960 = vunpack.c.h.b16 %v391
    %v961 = vunpack.c.l.b16 %v392
    %v962 = vunpack.c.h.b16 %v392
    %v963 = vunpack.c.l.b16 %v393
    %v964 = vunpack.c.l.b16 %v394
    %v965 = vunpack.c.h.b16 %v394
    %v966 = vunpack.c.l.b16 %v395
    %v967 = vunpack.c.h.b16 %v395
    %v968 = vunpack.c.l.b16 %v396
    %v969 = vunpack.c.h.b16 %v396
    %v970 = vunpack.c.l.b16 %v397
    %v971 = vunpack.c.l.b16 %v398
    %v972 = vunpack.c.h.b16 %v398
    %v973 = vunpack.c.l.b16 %v399
    %v974 = vunpack.c.h.b16 %v399
    %v975 = vunpack.c.l.b16 %v400
    %v976 = vunpack.c.h.b16 %v400
    %v977 = vunpack.c.l.b16 %v401
    %v978 = vunpack.c.l.b16 %v402
    %v979 = vunpack.c.h.b16 %v402
    %v980 = vunpack.c.l.b16 %v403
    %v981 = vunpack.c.h.b16 %v403
    %v982 = vunpack.c.l.b16 %v404
    %v983 = vunpack.c.h.b16 %v404
    %v984 = vunpack.c.l.b16 %v405
    %v985 = vunpack.c.l.b16 %v406
    %v986 = vunpack.c.h.b16 %v406
    %v987 = vunpack.c.l.b16 %v407
    %v988 = vunpack.c.h.b16 %v407
    %v989 = vunpack.c.l.b16 %v408
    %v990 = vunpack.c.h.b16 %v408
    %v991 = vunpack.c.l.b16 %v409
    %v992 = vunpack.c.l.b16 %v410
    %v993 = vunpack.c.h.b16 %v410
    %v994 = vunpack.c.l.b16 %v411
    %v995 = vunpack.c.h.b16 %v411
    %v996 = vunpack.c.l.b16 %v412
    %v997 = vunpack.c.h.b16 %v412
    %v998 = vunpack.c.l.b16 %v413
    %v999 = vunpack.c.l.b16 %v414
    %v1000 = vunpack.c.h.b16 %v414
    %v1001 = vunpack.c.l.b16 %v415
    %v1002 = vunpack.c.h.b16 %v415
    %v1003 = vunpack.c.l.b16 %v416
    %v1004 = vunpack.c.h.b16 %v416
    %v1005 = vunpack.c.l.b16 %v417
    %v1006 = vunpack.c.l.b16 %v418
    %v1007 = vunpack.c.h.b16 %v418
    %v1008 = vunpack.c.l.b16 %v419
    %v1009 = vunpack.c.h.b16 %v419
    %v1010 = vunpack.c.l.b16 %v420
    %v1011 = vunpack.c.h.b16 %v420
    %v1012 = vunpack.c.l.b16 %v421
    %v1013 = vunpack.c.l.b16 %v422
    %v1014 = vunpack.c.h.b16 %v422
    %v1015 = vunpack.c.l.b16 %v423
    %v1016 = vunpack.c.h.b16 %v423
    %v1017 = vunpack.c.l.b16 %v424
    %v1018 = vunpack.c.h.b16 %v424
    %v1019 = vunpack.c.l.b16 %v425
    %v1020 = vunpack.c.l.b16 %v426
    %v1021 = vunpack.c.h.b16 %v426
    %v1022 = vunpack.c.l.b16 %v427
    %v1023 = vunpack.c.h.b16 %v427
    %v1024 = vunpack.c.l.b16 %v428
    %v1025 = vunpack.c.h.b16 %v428
    %v1026 = vunpack.c.l.b16 %v429
    %v1027 = vunpack.c.l.b16 %v430
    %v1028 = vunpack.c.h.b16 %v430
    %v1029 = vunpack.c.l.b16 %v431
    %v1030 = vunpack.c.h.b16 %v431
    %v1031 = vunpack.c.l.b16 %v432
    %v1032 = vunpack.c.h.b16 %v432
    %v1033 = vunpack.c.l.b16 %v433
    %v1034 = vunpack.c.l.b16 %v434
    %v1035 = vunpack.c.h.b16 %v434
    %v1036 = vunpack.c.l.b16 %v435
    %v1037 = vunpack.c.h.b16 %v435
    %v1038 = vunpack.c.l.b16 %v436
    %v1039 = vunpack.c.h.b16 %v436
    %v1040 = vunpack.c.l.b16 %v437
    %v1041 = vunpack.c.l.b16 %v438
    %v1042 = vunpack.c.h.b16 %v438
    %v1043 = vunpack.c.l.b16 %v439
    %v1044 = vunpack.c.h.b16 %v439
    %v1045 = vunpack.c.l.b16 %v440
    %v1046 = vunpack.c.h.b16 %v440
    %v1047 = vunpack.c.l.b16 %v441
    %v1048 = vunpack.c.l.b16 %v442
    %v1049 = vunpack.c.h.b16 %v442
    %v1050 = vunpack.c.l.b16 %v443
    %v1051 = vunpack.c.h.b16 %v443
    %v1052 = vunpack.c.l.b16 %v444
    %v1053 = vunpack.c.h.b16 %v444
    %v1054 = vunpack.c.l.b16 %v445
    %v1055 = vunpack.c.l.b16 %v446
    %v1056 = vunpack.c.h.b16 %v446
    %v1057 = vunpack.c.l.b16 %v447
    %v1058 = vunpack.c.h.b16 %v447
    %v1059 = vunpack.c.l.b16 %v448
    %v1060 = vunpack.c.h.b16 %v448
    %v1061 = vunpack.c.l.b16 %v449
    %v1062 = vunpack.c.l.b16 %v450
    %v1063 = vunpack.c.h.b16 %v450
    %v1064 = vunpack.c.l.b16 %v451
    %v1065 = vunpack.c.h.b16 %v451
    %v1066 = vunpack.c.l.b16 %v452
    %v1067 = vunpack.c.h.b16 %v452
    %v1068 = vunpack.c.l.b16 %v453
    %v1069 = vunpack.c.l.b16 %v454
    %v1070 = vunpack.c.h.b16 %v454
    %v1071 = vunpack.c.l.b16 %v455
    %v1072 = vunpack.c.h.b16 %v455
    %v1073 = vunpack.c.l.b16 %v456
    %v1074 = vunpack.c.h.b16 %v456
    %v1075 = vunpack.c.l.b16 %v457
    %v1076 = vunpack.c.l.b16 %v458
    %v1077 = vunpack.c.h.b16 %v458
    %v1078 = vunpack.c.l.b16 %v459
    %v1079 = vunpack.c.h.b16 %v459
    %v1080 = vunpack.c.l.b16 %v460
    %v1081 = vunpack.c.h.b16 %v460
    %v1082 = vunpack.c.l.b16 %v461
    %v1083 = vunpack.c.l.b16 %v462
    %v1084 = vunpack.c.h.b16 %v462
    %v1085 = vunpack.c.l.b16 %v463
    %v1086 = vunpack.c.h.b16 %v463
    %v1087 = vunpack.c.l.b16 %v464
    %v1088 = vunpack.c.h.b16 %v464
    %v1089 = vunpack.c.l.b16 %v465
    %v1090 = vunpack.c.l.b16 %v466
    %v1091 = vunpack.c.h.b16 %v466
    %v1092 = vunpack.c.l.b16 %v467
    %v1093 = vunpack.c.h.b16 %v467
    %v1094 = vunpack.c.l.b16 %v468
    %v1095 = vunpack.c.h.b16 %v468
    %v1096 = vunpack.c.l.b16 %v469
    %v1097 = vunpack.c.l.b16 %v470
    %v1098 = vunpack.c.h.b16 %v470
    %v1099 = vunpack.c.l.b16 %v471
    %v1100 = vunpack.c.h.b16 %v471
    %v1101 = vunpack.c.l.b16 %v472
    %v1102 = vunpack.c.h.b16 %v472
    %v1103 = vunpack.c.l.b16 %v473
    %v1104 = vunpack.c.l.b16 %v474
    %v1105 = vunpack.c.h.b16 %v474
    %v1106 = vunpack.c.l.b16 %v475
    %v1107 = vunpack.c.h.b16 %v475
    %v1108 = vunpack.c.l.b16 %v476
    %v1109 = vunpack.c.h.b16 %v476
    %v1110 = vunpack.c.l.b16 %v477
    %v1111 = vunpack.c.l.b16 %v478
    %v1112 = vunpack.c.h.b16 %v478
    %v1113 = vunpack.c.l.b16 %v479
    %v1114 = vunpack.c.h.b16 %v479
    %v1115 = vunpack.c.l.b16 %v480
    %v1116 = vunpack.c.h.b16 %v480
    %v1117 = vunpack.c.l.b16 %v481
    %v1118 = vunpack.c.l.b16 %v482
    %v1119 = vunpack.c.h.b16 %v482
    %v1120 = vunpack.c.l.b16 %v483
    %v1121 = vunpack.c.h.b16 %v483
    %v1122 = vunpack.c.l.b16 %v484
    %v1123 = vunpack.c.h.b16 %v484
    %v1124 = vunpack.c.l.b16 %v485
    %v1125 = vunpack.c.l.b16 %v486
    %v1126 = vunpack.c.h.b16 %v486
    %v1127 = vunpack.c.l.b16 %v487
    %v1128 = vunpack.c.h.b16 %v487
    %v1129 = vunpack.c.l.b16 %v488
    %v1130 = vunpack.c.h.b16 %v488
    %v1131 = vunpack.c.l.b16 %v489
    %v1132 = vunpack.c.l.b16 %v490
    %v1133 = vunpack.c.h.b16 %v490
    %v1134 = vunpack.c.l.b16 %v491
    %v1135 = vunpack.c.h.b16 %v491
    %v1136 = vunpack.c.l.b16 %v492
    %v1137 = vunpack.c.h.b16 %v492
    %v1138 = vunpack.c.l.b16 %v493
    %v1139 = vunpack.c.l.b16 %v494
    %v1140 = vunpack.c.h.b16 %v494
    %v1141 = vunpack.c.l.b16 %v495
    %v1142 = vunpack.c.h.b16 %v495
    %v1143 = vunpack.c.l.b16 %v496
    %v1144 = vunpack.c.h.b16 %v496
    %v1145 = vunpack.c.l.b16 %v497
    %v1146 = vunpack.c.l.b16 %v498
    %v1147 = vunpack.c.h.b16 %v498
    %v1148 = vunpack.c.l.b16 %v499
    %v1149 = vunpack.c.h.b16 %v499
    %v1150 = vunpack.c.l.b16 %v500
    %v1151 = vunpack.c.h.b16 %v500
    %v1152 = vunpack.c.l.b16 %v501
    %v1153 = vunpack.c.l.b16 %v502
    %v1154 = vunpack.c.h.b16 %v502
    %v1155 = vunpack.c.l.b16 %v503
    %v1156 = vunpack.c.h.b16 %v503
    %v1157 = vunpack.c.l.b16 %v504
    %v1158 = vunpack.c.h.b16 %v504
    %v1159 = vunpack.c.l.b16 %v505
    %v1160 = vunpack.c.l.b16 %v506
    %v1161 = vunpack.c.h.b16 %v506
    %v1162 = vunpack.c.l.b16 %v507
    %v1163 = vunpack.c.h.b16 %v507
    %v1164 = vunpack.c.l.b16 %v508
    %v1165 = vunpack.c.h.b16 %v508
    %v1166 = vunpack.c.l.b16 %v509
    %v1167 = vunpack.c.l.b16 %v510
    %v1168 = vunpack.c.h.b16 %v510
    %v1169 = vunpack.c.l.b16 %v511
    %v1170 = vunpack.c.h.b16 %v511
    %v1171 = vunpack.c.l.b16 %v512
    %v1172 = vunpack.c.h.b16 %v512
    %v1173 = vunpack.c.l.b16 %v513
    %v1174 = vunpack.c.l.b16 %v514
    %v1175 = vunpack.c.h.b16 %v514
    %v1176 = vunpack.c.l.b16 %v515
    %v1177 = vunpack.c.h.b16 %v515
    %v1178 = vunpack.c.l.b16 %v516
    %v1179 = vunpack.c.h.b16 %v516
    %v1180 = vunpack.c.l.b16 %v517
    %v1181 = vunpack.c.l.b16 %v518
    %v1182 = vunpack.c.h.b16 %v518
    %v1183 = vunpack.c.l.b16 %v519
    %v1184 = vunpack.c.h.b16 %v519
    %v1185 = vunpack.c.l.b16 %v520
    %v1186 = vunpack.c.h.b16 %v520
    %v1187 = vunpack.c.l.b16 %v521
    %v1188 = vunpack.c.l.b16 %v522
    %v1189 = vunpack.c.h.b16 %v522
    %v1190 = vunpack.c.l.b16 %v523
    %v1191 = vunpack.c.h.b16 %v523
    %v1192 = vunpack.c.l.b16 %v524
    %v1193 = vunpack.c.h.b16 %v524
    %v1194 = vunpack.c.l.b16 %v525
    %v1195 = vunpack.c.l.b16 %v526
    %v1196 = vunpack.c.h.b16 %v526
    %v1197 = vunpack.c.l.b16 %v527
    %v1198 = vunpack.c.h.b16 %v527
    %v1199 = vunpack.c.l.b16 %v528
    %v1200 = vunpack.c.h.b16 %v528
    %v1201 = vunpack.c.l.b16 %v529
    %v1202 = vunpack.c.l.b16 %v530
    %v1203 = vunpack.c.h.b16 %v530
    %v1204 = vunpack.c.l.b16 %v531
    %v1205 = vunpack.c.h.b16 %v531
    %v1206 = vunpack.c.l.b16 %v532
    %v1207 = vunpack.c.h.b16 %v532
    %v1208 = vunpack.c.l.b16 %v533
    %v1209 = vunpack.c.l.b16 %v534
    %v1210 = vunpack.c.h.b16 %v534
    %v1211 = vunpack.c.l.b16 %v535
    %v1212 = vunpack.c.h.b16 %v535
    %v1213 = vunpack.c.l.b16 %v536
    %v1214 = vunpack.c.h.b16 %v536
    %v1215 = vunpack.c.l.b16 %v537
    %v1216 = vunpack.c.l.b16 %v538
    %v1217 = vunpack.c.h.b16 %v538
    %v1218 = vunpack.c.l.b16 %v539
    %v1219 = vunpack.c.h.b16 %v539
    %v1220 = vunpack.c.l.b16 %v540
    %v1221 = vunpack.c.h.b16 %v540
    %v1222 = vunpack.c.l.b16 %v541
    %v1223 = vunpack.c.l.b16 %v542
    %v1224 = vunpack.c.h.b16 %v542
    %v1225 = vunpack.c.l.b16 %v543
    %v1226 = vunpack.c.h.b16 %v543
    %v1227 = vunpack.c.l.b16 %v544
    %v1228 = vunpack.c.h.b16 %v544
    %v1229 = vunpack.c.l.b16 %v545
    %v1230 = vunpack.c.l.b16 %v546
    %v1231 = vunpack.c.h.b16 %v546
    %v1232 = vunpack.c.l.b16 %v547
    %v1233 = vunpack.c.h.b16 %v547
    %v1234 = vunpack.c.l.b16 %v548
    %v1235 = vunpack.c.h.b16 %v548
    %v1236 = vunpack.c.l.b16 %v549
    %v1237 = vunpack.c.l.b16 %v550
    %v1238 = vunpack.c.h.b16 %v550
    %v1239 = vunpack.c.l.b16 %v551
    %v1240 = vunpack.c.h.b16 %v551
    %v1241 = vunpack.c.l.b16 %v552
    %v1242 = vunpack.c.h.b16 %v552
    %v1243 = vunpack.c.l.b16 %v553
    %v1244 = vunpack.c.l.b16 %v554
    %v1245 = vunpack.c.h.b16 %v554
    %v1246 = vunpack.c.l.b16 %v555
    %v1247 = vunpack.c.h.b16 %v555
    %v1248 = vunpack.c.l.b16 %v556
    %v1249 = vunpack.c.h.b16 %v556
    %v1250 = vunpack.c.l.b16 %v557
    %v1251 = vunpack.c.l.b16 %v558
    %v1252 = vunpack.c.h.b16 %v558
    %v1253 = vunpack.c.l.b16 %v559
    %v1254 = vunpack.c.h.b16 %v559
    %v1255 = vunpack.c.l.b16 %v560
    %v1256 = vunpack.c.h.b16 %v560
    %v1257 = vunpack.c.l.b16 %v561
    %v1258 = vunpack.c.l.b16 %v562
    %v1259 = vunpack.c.h.b16 %v562
    %v1260 = vunpack.c.l.b16 %v563
    %v1261 = vunpack.c.h.b16 %v563
    %v1262 = vunpack.c.l.b16 %v564
    %v1263 = vunpack.c.h.b16 %v564
    %v1264 = vunpack.c.l.b16 %v565
    %v1265 = vunpack.c.l.b16 %v566
    %v1266 = vunpack.c.h.b16 %v566
    %v1267 = vunpack.c.l.b16 %v567
    %v1268 = vunpack.c.h.b16 %v567
    %v1269 = vunpack.c.l.b16 %v568
    %v1270 = vunpack.c.h.b16 %v568
    %v1271 = vunpack.c.l.b16 %v569
    %v1272 = vunpack.c.l.b16 %v570
    %v1273 = vunpack.c.h.b16 %v570
    %v1274 = vunpack.c.l.b16 %v571
    %v1275 = vunpack.c.h.b16 %v571
    %v1276 = vunpack.c.l.b16 %v572
    %v1277 = vunpack.c.h.b16 %v572
    %v1278 = vunpack.c.l.b16 %v573
    %v1279 = vunpack.c.l.b16 %v574
    %v1280 = vunpack.c.h.b16 %v574
    %v1281 = vunpack.c.l.b16 %v575
    %v1282 = vunpack.c.h.b16 %v575
    %v1283 = vunpack.c.l.b16 %v576
    %v1284 = vunpack.c.h.b16 %v576
    %v1285 = vunpack.c.l.b16 %v577
    %v1286 = vunpack.c.l.b16 %v578
    %v1287 = vunpack.c.h.b16 %v578
    %v1288 = vunpack.c.l.b16 %v579
    %v1289 = vunpack.c.h.b16 %v579
    %v1290 = vunpack.c.l.b16 %v580
    %v1291 = vunpack.c.h.b16 %v580
    %v1292 = vunpack.c.l.b16 %v581
    %v1293 = vunpack.c.l.b16 %v582
    %v1294 = vunpack.c.h.b16 %v582
    %v1295 = vunpack.c.l.b16 %v583
    %v1296 = vunpack.c.h.b16 %v583
    %v1297 = vunpack.c.l.b16 %v584
    %v1298 = vunpack.c.h.b16 %v584
    %v1299 = vunpack.c.l.b16 %v585
    %v1300 = vunpack.c.l.b16 %v586
    %v1301 = vunpack.c.h.b16 %v586
    %v1302 = vunpack.c.l.b16 %v587
    %v1303 = vunpack.c.h.b16 %v587
    %v1304 = vunpack.c.l.b16 %v588
    %v1305 = vunpack.c.h.b16 %v588
    %v1306 = vunpack.c.l.b16 %v589
    %v1307 = vunpack.c.l.b16 %v590
    %v1308 = vunpack.c.h.b16 %v590
    %v1309 = vunpack.c.l.b16 %v591
    %v1310 = vunpack.c.h.b16 %v591
    %v1311 = vunpack.c.l.b16 %v592
    %v1312 = vunpack.c.h.b16 %v592
    %v1313 = vunpack.c.l.b16 %v593
    %v1314 = vunpack.c.l.b16 %v594
    %v1315 = vunpack.c.h.b16 %v594
    %v1316 = vunpack.c.l.b16 %v595
    %v1317 = vunpack.c.h.b16 %v595
    %v1318 = vunpack.c.l.b16 %v596
    %v1319 = vunpack.c.h.b16 %v596
    %v1320 = vunpack.c.l.b16 %v597
    %v1321 = vunpack.c.l.b16 %v598
    %v1322 = vunpack.c.h.b16 %v598
    %v1323 = vunpack.c.l.b16 %v599
    %v1324 = vunpack.c.h.b16 %v599
    %v1325 = vunpack.c.l.b16 %v600
    %v1326 = vunpack.c.h.b16 %v600
    %v1327 = vunpack.c.l.b16 %v601
    %v1328 = vunpack.c.l.b16 %v602
    %v1329 = vunpack.c.h.b16 %v602
    %v1330 = vunpack.c.l.b16 %v603
    %v1331 = vunpack.c.h.b16 %v603
    %v1332 = vunpack.c.l.b16 %v604
    %v1333 = vunpack.c.h.b16 %v604
    %v1334 = vunpack.c.l.b16 %v605
    %v1335 = vunpack.c.l.b16 %v606
    %v1336 = vunpack.c.h.b16 %v606
    %v1337 = vunpack.c.l.b16 %v607
    %v1338 = vunpack.c.h.b16 %v607
    %v1339 = vunpack.c.l.b16 %v608
    %v1340 = vunpack.c.h.b16 %v608
    %v1341 = vunpack.c.l.b16 %v609
    %v1342 = vunpack.c.l.b16 %v610
    %v1343 = vunpack.c.h.b16 %v610
    %v1344 = vunpack.c.l.b16 %v611
    %v1345 = vunpack.c.h.b16 %v611
    %v1346 = vunpack.c.l.b16 %v612
    %v1347 = vunpack.c.h.b16 %v612
    %v1348 = vunpack.c.l.b16 %v613
    %v1349 = vunpack.c.l.b16 %v614
    %v1350 = vunpack.c.h.b16 %v614
    %v1351 = vunpack.c.l.b16 %v615
    %v1352 = vunpack.c.h.b16 %v615
    %v1353 = vunpack.c.l.b16 %v616
    %v1354 = vunpack.c.h.b16 %v616
    %v1355 = vunpack.c.l.b16 %v617
    %v1356 = vunpack.c.l.b16 %v618
    %v1357 = vunpack.c.h.b16 %v618
    %v1358 = vunpack.c.l.b16 %v619
    %v1359 = vunpack.c.h.b16 %v619
    %v1360 = vunpack.c.l.b16 %v620
    %v1361 = vunpack.c.h.b16 %v620
    %v1362 = vunpack.c.l.b16 %v621
    %v1363 = vpack.c.b16 %v922, %v915
    %v1364 = vpack.c.b16 %v923, %v916
    %v1365 = vpack.c.b16 %v924, %v917
    %v1366 = vpack.c.b16 %v925, %v918
    %v1367 = vpack.c.b16 %v926, %v919
    %v1368 = vpack.c.b16 %v927, %v920
    %v1369 = vpack.c.b16 %v928, %v921
    %v1370 = vpack.c.b16 %v936, %v929
    %v1371 = vpack.c.b16 %v937, %v930
    %v1372 = vpack.c.b16 %v938, %v931
    %v1373 = vpack.c.b16 %v939, %v932
    %v1374 = vpack.c.b16 %v940, %v933
    %v1375 = vpack.c.b16 %v941, %v934
    %v1376 = vpack.c.b16 %v942, %v935
    %v1377 = vpack.c.b16 %v950, %v943
    %v1378 = vpack.c.b16 %v951, %v944
    %v1379 = vpack.c.b16 %v952, %v945
    %v1380 = vpack.c.b16 %v953, %v946
    %v1381 = vpack.c.b16 %v954, %v947
    %v1382 = vpack.c.b16 %v955, %v948
    %v1383 = vpack.c.b16 %v956, %v949
    %v1384 = vpack.c.b16 %v964, %v957
    %v1385 = vpack.c.b16 %v965, %v958
    %v1386 = vpack.c.b16 %v966, %v959
    %v1387 = vpack.c.b16 %v967, %v960
    %v1388 = vpack.c.b16 %v968, %v961
    %v1389 = vpack.c.b16 %v969, %v962
    %v1390 = vpack.c.b16 %v970, %v963
    %v1391 = vpack.c.b16 %v978, %v971
    %v1392 = vpack.c.b16 %v979, %v972
    %v1393 = vpack.c.b16 %v980, %v973
    %v1394 = vpack.c.b16 %v981, %v974
    %v1395 = vpack.c.b16 %v982, %v975
    %v1396 = vpack.c.b16 %v983, %v976
    %v1397 = vpack.c.b16 %v984, %v977
    %v1398 = vpack.c.b16 %v992, %v985
    %v1399 = vpack.c.b16 %v993, %v986
    %v1400 = vpack.c.b16 %v994, %v987
    %v1401 = vpack.c.b16 %v995, %v988
    %v1402 = vpack.c.b16 %v996, %v989
    %v1403 = vpack.c.b16 %v997, %v990
    %v1404 = vpack.c.b16 %v998, %v991
    %v1405 = vpack.c.b16 %v1006, %v999
    %v1406 = vpack.c.b16 %v1007, %v1000
    %v1407 = vpack.c.b16 %v1008, %v1001
    %v1408 = vpack.c.b16 %v1009, %v1002
    %v1409 = vpack.c.b16 %v1010, %v1003
    %v1410 = vpack.c.b16 %v1011, %v1004
    %v1411 = vpack.c.b16 %v1012, %v1005
    %v1412 = vpack.c.b16 %v1020, %v1013
    %v1413 = vpack.c.b16 %v1021, %v1014
    %v1414 = vpack.c.b16 %v1022, %v1015
    %v1415 = vpack.c.b16 %v1023, %v1016
    %v1416 = vpack.c.b16 %v1024, %v1017
    %v1417 = vpack.c.b16 %v1025, %v1018
    %v1418 = vpack.c.b16 %v1026, %v1019
    %v1419 = vpack.c.b16 %v1034, %v1027
    %v1420 = vpack.c.b16 %v1035, %v1028
    %v1421 = vpack.c.b16 %v1036, %v1029
    %v1422 = vpack.c.b16 %v1037, %v1030
    %v1423 = vpack.c.b16 %v1038, %v1031
    %v1424 = vpack.c.b16 %v1039, %v1032
    %v1425 = vpack.c.b16 %v1040, %v1033
    %v1426 = vpack.c.b16 %v1048, %v1041
    %v1427 = vpack.c.b16 %v1049, %v1042
    %v1428 = vpack.c.b16 %v1050, %v1043
    %v1429 = vpack.c.b16 %v1051, %v1044
    %v1430 = vpack.c.b16 %v1052, %v1045
    %v1431 = vpack.c.b16 %v1053, %v1046
    %v1432 = vpack.c.b16 %v1054, %v1047
    %v1433 = vpack.c.b16 %v1062, %v1055
    %v1434 = vpack.c.b16 %v1063, %v1056
    %v1435 = vpack.c.b16 %v1064, %v1057
    %v1436 = vpack.c.b16 %v1065, %v1058
    %v1437 = vpack.c.b16 %v1066, %v1059
    %v1438 = vpack.c.b16 %v1067, %v1060
    %v1439 = vpack.c.b16 %v1068, %v1061
    %v1440 = vpack.c.b16 %v1076, %v1069
    %v1441 = vpack.c.b16 %v1077, %v1070
    %v1442 = vpack.c.b16 %v1078, %v1071
    %v1443 = vpack.c.b16 %v1079, %v1072
    %v1444 = vpack.c.b16 %v1080, %v1073
    %v1445 = vpack.c.b16 %v1081, %v1074
    %v1446 = vpack.c.b16 %v1082, %v1075
    %v1447 = vpack.c.b16 %v1090, %v1083
    %v1448 = vpack.c.b16 %v1091, %v1084
    %v1449 = vpack.c.b16 %v1092, %v1085
    %v1450 = vpack.c.b16 %v1093, %v1086
    %v1451 = vpack.c.b16 %v1094, %v1087
    %v1452 = vpack.c.b16 %v1095, %v1088
    %v1453 = vpack.c.b16 %v1096, %v1089
    %v1454 = vpack.c.b16 %v1104, %v1097
    %v1455 = vpack.c.b16 %v1105, %v1098
    %v1456 = vpack.c.b16 %v1106, %v1099
    %v1457 = vpack.c.b16 %v1107, %v1100
    %v1458 = vpack.c.b16 %v1108, %v1101
    %v1459 = vpack.c.b16 %v1109, %v1102
    %v1460 = vpack.c.b16 %v1110, %v1103
    %v1461 = vpack.c.b16 %v1118, %v1111
    %v1462 = vpack.c.b16 %v1119, %v1112
    %v1463 = vpack.c.b16 %v1120, %v1113
    %v1464 = vpack.c.b16 %v1121, %v1114
    %v1465 = vpack.c.b16 %v1122, %v1115
    %v1466 = vpack.c.b16 %v1123, %v1116
    %v1467 = vpack.c.b16 %v1124, %v1117
    %v1468 = vpack.c.b16 %v1132, %v1125
    %v1469 = vpack.c.b16 %v1133, %v1126
    %v1470 = vpack.c.b16 %v1134, %v1127
    %v1471 = vpack.c.b16 %v1135, %v1128
    %v1472 = vpack.c.b16 %v1136, %v1129
    %v1473 = vpack.c.b16 %v1137, %v1130
    %v1474 = vpack.c.b16 %v1138, %v1131
    %v1475 = vpack.c.b16 %v1146, %v1139
    %v1476 = vpack.c.b16 %v1147, %v1140
    %v1477 = vpack.c.b16 %v1148, %v1141
    %v1478 = vpack.c.b16 %v1149, %v1142
    %v1479 = vpack.c.b16 %v1150, %v1143
    %v1480 = vpack.c.b16 %v1151, %v1144
    %v1481 = vpack.c.b16 %v1152, %v1145
    %v1482 = vpack.c.b16 %v1160, %v1153
    %v1483 = vpack.c.b16 %v1161, %v1154
    %v1484 = vpack.c.b16 %v1162, %v1155
    %v1485 = vpack.c.b16 %v1163, %v1156
    %v1486 = vpack.c.b16 %v1164, %v1157
    %v1487 = vpack.c.b16 %v1165, %v1158
    %v1488 = vpack.c.b16 %v1166, %v1159
    %v1489 = vpack.c.b16 %v1174, %v1167
    %v1490 = vpack.c.b16 %v1175, %v1168
    %v1491 = vpack.c.b16 %v1176, %v1169
    %v1492 = vpack.c.b16 %v1177, %v1170
    %v1493 = vpack.c.b16 %v1178, %v1171
    %v1494 = vpack.c.b16 %v1179, %v1172
    %v1495 = vpack.c.b16 %v1180, %v1173
    %v1496 = vpack.c.b16 %v1188, %v1181
    %v1497 = vpack.c.b16 %v1189, %v1182
    %v1498 = vpack.c.b16 %v1190, %v1183
    %v1499 = vpack.c.b16 %v1191, %v1184
    %v1500 = vpack.c.b16 %v1192, %v1185
    %v1501 = vpack.c.b16 %v1193, %v1186
    %v1502 = vpack.c.b16 %v1194, %v1187
    %v1503 = vpack.c.b16 %v1202, %v1195
    %v1504 = vpack.c.b16 %v1203, %v1196
    %v1505 = vpack.c.b16 %v1204, %v1197
    %v1506 = vpack.c.b16 %v1205, %v1198
    %v1507 = vpack.c.b16 %v1206, %v1199
    %v1508 = vpack.c.b16 %v1207, %v1200
    %v1509 = vpack.c.b16 %v1208, %v1201
    %v1510 = vpack.c.b16 %v1216, %v1209
    %v1511 = vpack.c.b16 %v1217, %v1210
    %v1512 = vpack.c.b16 %v1218, %v1211
    %v1513 = vpack.c.b16 %v1219, %v1212
    %v1514 = vpack.c.b16 %v1220, %v1213
    %v1515 = vpack.c.b16 %v1221, %v1214
    %v1516 = vpack.c.b16 %v1222, %v1215
    %v1517 = vpack.c.b16 %v1230, %v1223
    %v1518 = vpack.c.b16 %v1231, %v1224
    %v1519 = vpack.c.b16 %v1232, %v1225
    %v1520 = vpack.c.b16 %v1233, %v1226
    %v1521 = vpack.c.b16 %v1234, %v1227
    %v1522 = vpack.c.b16 %v1235, %v1228
    %v1523 = vpack.c.b16 %v1236, %v1229
    %v1524 = vpack.c.b16 %v1244, %v1237
    %v1525 = vpack.c.b16 %v1245, %v1238
    %v1526 = vpack.c.b16 %v1246, %v1239
    %v1527 = vpack.c.b16 %v1247, %v1240
    %v1528 = vpack.c.b16 %v1248, %v1241
    %v1529 = vpack.c.b16 %v1249, %v1242
    %v1530 = vpack.c.b16 %v1250, %v1243
    %v1531 = vpack.c.b16 %v1258, %v1251
    %v1532 = vpack.c.b16 %v1259, %v1252
    %v1533 = vpack.c.b16 %v1260, %v1253
    %v1534 = vpack.c.b16 %v1261, %v1254
    %v1535 = vpack.c.b16 %v1262, %v1255
    %v1536 = vpack.c.b16 %v1263, %v1256
    %v1537 = vpack.c.b16 %v1264, %v1257
    %v1538 = vpack.c.b16 %v1272, %v1265
    %v1539 = vpack.c.b16 %v1273, %v1266
    %v1540 = vpack.c.b16 %v1274, %v1267
    %v1541 = vpack.c.b16 %v1275, %v1268
    %v1542 = vpack.c.b16 %v1276, %v1269
    %v1543 = vpack.c.b16 %v1277, %v1270
    %v1544 = vpack.c.b16 %v1278, %v1271
    %v1545 = vpack.c.b16 %v1286, %v1279
    %v1546 = vpack.c.b16 %v1287, %v1280
    %v1547 = vpack.c.b16 %v1288, %v1281
    %v1548 = vpack.c.b16 %v1289, %v1282
    %v1549 = vpack.c.b16 %v1290, %v1283
    %v1550 = vpack.c.b16 %v1291, %v1284
    %v1551 = vpack.c.b16 %v1292, %v1285
    %v1552 = vpack.c.b16 %v1300, %v1293
    %v1553 = vpack.c.b16 %v1301, %v1294
    %v1554 = vpack.c.b16 %v1302, %v1295
    %v1555 = vpack.c.b16 %v1303, %v1296
    %v1556 = vpack.c.b16 %v1304, %v1297
    %v1557 = vpack.c.b16 %v1305, %v1298
    %v1558 = vpack.c.b16 %v1306, %v1299
    %v1559 = vpack.c.b16 %v1314, %v1307
    %v1560 = vpack.c.b16 %v1315, %v1308
    %v1561 = vpack.c.b16 %v1316, %v1309
    %v1562 = vpack.c.b16 %v1317, %v1310
    %v1563 = vpack.c.b16 %v1318, %v1311
    %v1564 = vpack.c.b16 %v1319, %v1312
    %v1565 = vpack.c.b16 %v1320, %v1313
    %v1566 = vpack.c.b16 %v1328, %v1321
    %v1567 = vpack.c.b16 %v1329, %v1322
    %v1568 = vpack.c.b16 %v1330, %v1323
    %v1569 = vpack.c.b16 %v1331, %v1324
    %v1570 = vpack.c.b16 %v1332, %v1325
    %v1571 = vpack.c.b16 %v1333, %v1326
    %v1572 = vpack.c.b16 %v1334, %v1327
    %v1573 = vpack.c.b16 %v1342, %v1335
    %v1574 = vpack.c.b16 %v1343, %v1336
    %v1575 = vpack.c.b16 %v1344, %v1337
    %v1576 = vpack.c.b16 %v1345, %v1338
    %v1577 = vpack.c.b16 %v1346, %v1339
    %v1578 = vpack.c.b16 %v1347, %v1340
    %v1579 = vpack.c.b16 %v1348, %v1341
    %v1580 = vpack.c.b16 %v1356, %v1349
    %v1581 = vpack.c.b16 %v1357, %v1350
    %v1582 = vpack.c.b16 %v1358, %v1351
    %v1583 = vpack.c.b16 %v1359, %v1352
    %v1584 = vpack.c.b16 %v1360, %v1353
    %v1585 = vpack.c.b16 %v1361, %v1354
    %v1586 = vpack.c.b16 %v1362, %v1355
    %1811 = vmatprep.subr.bf16.mxu0 %v1364
    %1812 = vmatpush1.bf16.msra.mxu0 %v1363
    %1813 = vmatprep.subr.bf16.mxu0 %v1371
    %1814 = vmatpush1.bf16.msra.mxu0 %v1370
    %1815 = vmatprep.subr.bf16.mxu0 %v1378
    %1816 = vmatpush1.bf16.msra.mxu0 %v1377
    %1817 = vmatprep.subr.bf16.mxu0 %v1385
    %1818 = vmatpush1.bf16.msra.mxu0 %v1384
    %1819 = vmatprep.subr.bf16.mxu0 %v1392
    %1820 = vmatpush1.bf16.msra.mxu0 %v1391
    %1821 = vmatprep.subr.bf16.mxu0 %v1399
    %1822 = vmatpush1.bf16.msra.mxu0 %v1398
    %1823 = vmatprep.subr.bf16.mxu0 %v1406
    %1824 = vmatpush1.bf16.msra.mxu0 %v1405
    %1825 = vmatprep.subr.bf16.mxu0 %v1413
    %1826 = vmatpush1.bf16.msra.mxu0 %v1412
    %1827 = vmatprep.subr.bf16.mxu0 %v1420
    %1828 = vmatpush1.bf16.msra.mxu0 %v1419
    %1829 = vmatprep.subr.bf16.mxu0 %v1427
    %1830 = vmatpush1.bf16.msra.mxu0 %v1426
    %1831 = vmatprep.subr.bf16.mxu0 %v1434
    %1832 = vmatpush1.bf16.msra.mxu0 %v1433
    %1833 = vmatprep.subr.bf16.mxu0 %v1441
    %1834 = vmatpush1.bf16.msra.mxu0 %v1440
    %1835 = vmatprep.subr.bf16.mxu0 %v1448
    %1836 = vmatpush1.bf16.msra.mxu0 %v1447
    %1837 = vmatprep.subr.bf16.mxu0 %v1455
    %1838 = vmatpush1.bf16.msra.mxu0 %v1454
    %1839 = vmatprep.subr.bf16.mxu0 %v1462
    %1840 = vmatpush1.bf16.msra.mxu0 %v1461
    %1841 = vmatprep.subr.bf16.mxu0 %v1469
    %1842 = vmatpush1.bf16.msra.mxu0 %v1468
    %1843 = vmatprep.mubr.bf16.mxu0 %v363
    %1844 = vmatmul.mubr.bf16.gmra.mrb[0].mxu0 %v362
    %v1845 = vpop.f32.mrb[0].mxu0
    %v1846 = vadd.f32 %v627, %v1845
    %v1847 = vpop.f32.mrb[0].mxu0
    %v1848 = vadd.f32 %v631, %v1847
    %v1849 = vpop.f32.mrb[0].mxu0
    %v1850 = vpop.f32.mrb[0].mxu0
    %1851 = vdwg.mxu0
    %1852 = vmatprep.subr.bf16.mxu0 %v1476
    %1853 = vmatpush1.bf16.msra.mxu0 %v1475
    %1854 = vmatprep.subr.bf16.mxu0 %v1483
    %1855 = vmatpush1.bf16.msra.mxu0 %v1482
    %1856 = vmatprep.subr.bf16.mxu0 %v1490
    %1857 = vmatpush1.bf16.msra.mxu0 %v1489
    %1858 = vmatprep.subr.bf16.mxu0 %v1497
    %1859 = vmatpush1.bf16.msra.mxu0 %v1496
    %1860 = vmatprep.subr.bf16.mxu0 %v1504
    %1861 = vmatpush1.bf16.msra.mxu0 %v1503
    %1862 = vmatprep.subr.bf16.mxu0 %v1511
    %1863 = vmatpush1.bf16.msra.mxu0 %v1510
    %1864 = vmatprep.subr.bf16.mxu0 %v1518
    %1865 = vmatpush1.bf16.msra.mxu0 %v1517
    %1866 = vmatprep.subr.bf16.mxu0 %v1525
    %1867 = vmatpush1.bf16.msra.mxu0 %v1524
    %1868 = vmatprep.subr.bf16.mxu0 %v1532
    %1869 = vmatpush1.bf16.msra.mxu0 %v1531
    %1870 = vmatprep.subr.bf16.mxu0 %v1539
    %1871 = vmatpush1.bf16.msra.mxu0 %v1538
    %1872 = vmatprep.subr.bf16.mxu0 %v1546
    %1873 = vmatpush1.bf16.msra.mxu0 %v1545
    %1874 = vmatprep.subr.bf16.mxu0 %v1553
    %1875 = vmatpush1.bf16.msra.mxu0 %v1552
    %1876 = vmatprep.subr.bf16.mxu0 %v1560
    %1877 = vmatpush1.bf16.msra.mxu0 %v1559
    %1878 = vmatprep.subr.bf16.mxu0 %v1567
    %1879 = vmatpush1.bf16.msra.mxu0 %v1566
    %1880 = vmatprep.subr.bf16.mxu0 %v1574
    %1881 = vmatpush1.bf16.msra.mxu0 %v1573
    %1882 = vmatprep.subr.bf16.mxu0 %v1581
    %1883 = vmatpush1.bf16.msra.mxu0 %v1580
    %1884 = vmatprep.mubr.bf16.mxu0 %v365
    %1885 = vmatmul.mubr.bf16.gmra.mrb[0].mxu0 %v364
    %v1886 = vpop.f32.mrb[0].mxu0
    %v1887 = vadd.f32 %v1846, %v1886
    %v1888 = vpop.f32.mrb[0].mxu0
    %v1889 = vadd.f32 %v1848, %v1888
    %v1890 = vpop.f32.mrb[0].mxu0
    %v1891 = vpop.f32.mrb[0].mxu0
    %1892 = vdwg.mxu0
    %1893 = vmatprep.subr.bf16.mxu0 %v1366
    %1894 = vmatpush1.bf16.msra.mxu0 %v1365
    %1895 = vmatprep.subr.bf16.mxu0 %v1373
    %1896 = vmatpush1.bf16.msra.mxu0 %v1372
    %1897 = vmatprep.subr.bf16.mxu0 %v1380
    %1898 = vmatpush1.bf16.msra.mxu0 %v1379
    %1899 = vmatprep.subr.bf16.mxu0 %v1387
    %1900 = vmatpush1.bf16.msra.mxu0 %v1386
    %1901 = vmatprep.subr.bf16.mxu0 %v1394
    %1902 = vmatpush1.bf16.msra.mxu0 %v1393
    %1903 = vmatprep.subr.bf16.mxu0 %v1401
    %1904 = vmatpush1.bf16.msra.mxu0 %v1400
    %1905 = vmatprep.subr.bf16.mxu0 %v1408
    %1906 = vmatpush1.bf16.msra.mxu0 %v1407
    %1907 = vmatprep.subr.bf16.mxu0 %v1415
    %1908 = vmatpush1.bf16.msra.mxu0 %v1414
    %1909 = vmatprep.subr.bf16.mxu0 %v1422
    %1910 = vmatpush1.bf16.msra.mxu0 %v1421
    %1911 = vmatprep.subr.bf16.mxu0 %v1429
    %1912 = vmatpush1.bf16.msra.mxu0 %v1428
    %1913 = vmatprep.subr.bf16.mxu0 %v1436
    %1914 = vmatpush1.bf16.msra.mxu0 %v1435
    %1915 = vmatprep.subr.bf16.mxu0 %v1443
    %1916 = vmatpush1.bf16.msra.mxu0 %v1442
    %1917 = vmatprep.subr.bf16.mxu0 %v1450
    %1918 = vmatpush1.bf16.msra.mxu0 %v1449
    %1919 = vmatprep.subr.bf16.mxu0 %v1457
    %1920 = vmatpush1.bf16.msra.mxu0 %v1456
    %1921 = vmatprep.subr.bf16.mxu0 %v1464
    %1922 = vmatpush1.bf16.msra.mxu0 %v1463
    %1923 = vmatprep.subr.bf16.mxu0 %v1471
    %1924 = vmatpush1.bf16.msra.mxu0 %v1470
    %1925 = vmatprep.mubr.bf16.mxu0 %v363
    %1926 = vmatmul.mubr.bf16.gmra.mrb[0].mxu0 %v362
    %v1927 = vpop.f32.mrb[0].mxu0
    %v1928 = vadd.f32 %v635, %v1927
    %v1929 = vpop.f32.mrb[0].mxu0
    %v1930 = vadd.f32 %v639, %v1929
    %v1931 = vpop.f32.mrb[0].mxu0
    %v1932 = vpop.f32.mrb[0].mxu0
    %1933 = vdwg.mxu0
    %1934 = vmatprep.subr.bf16.mxu0 %v1478
    %1935 = vmatpush1.bf16.msra.mxu0 %v1477
    %1936 = vmatprep.subr.bf16.mxu0 %v1485
    %1937 = vmatpush1.bf16.msra.mxu0 %v1484
    %1938 = vmatprep.subr.bf16.mxu0 %v1492
    %1939 = vmatpush1.bf16.msra.mxu0 %v1491
    %1940 = vmatprep.subr.bf16.mxu0 %v1499
    %1941 = vmatpush1.bf16.msra.mxu0 %v1498
    %1942 = vmatprep.subr.bf16.mxu0 %v1506
    %1943 = vmatpush1.bf16.msra.mxu0 %v1505
    %1944 = vmatprep.subr.bf16.mxu0 %v1513
    %1945 = vmatpush1.bf16.msra.mxu0 %v1512
    %1946 = vmatprep.subr.bf16.mxu0 %v1520
    %1947 = vmatpush1.bf16.msra.mxu0 %v1519
    %1948 = vmatprep.subr.bf16.mxu0 %v1527
    %1949 = vmatpush1.bf16.msra.mxu0 %v1526
    %1950 = vmatprep.subr.bf16.mxu0 %v1534
    %1951 = vmatpush1.bf16.msra.mxu0 %v1533
    %1952 = vmatprep.subr.bf16.mxu0 %v1541
    %1953 = vmatpush1.bf16.msra.mxu0 %v1540
    %1954 = vmatprep.subr.bf16.mxu0 %v1548
    %1955 = vmatpush1.bf16.msra.mxu0 %v1547
    %1956 = vmatprep.subr.bf16.mxu0 %v1555
    %1957 = vmatpush1.bf16.msra.mxu0 %v1554
    %1958 = vmatprep.subr.bf16.mxu0 %v1562
    %1959 = vmatpush1.bf16.msra.mxu0 %v1561
    %1960 = vmatprep.subr.bf16.mxu0 %v1569
    %1961 = vmatpush1.bf16.msra.mxu0 %v1568
    %1962 = vmatprep.subr.bf16.mxu0 %v1576
    %1963 = vmatpush1.bf16.msra.mxu0 %v1575
    %1964 = vmatprep.subr.bf16.mxu0 %v1583
    %1965 = vmatpush1.bf16.msra.mxu0 %v1582
    %1966 = vmatprep.mubr.bf16.mxu0 %v365
    %1967 = vmatmul.mubr.bf16.gmra.mrb[0].mxu0 %v364
    %v1968 = vpop.f32.mrb[0].mxu0
    %v1969 = vadd.f32 %v1928, %v1968
    %v1970 = vpop.f32.mrb[0].mxu0
    %v1971 = vadd.f32 %v1930, %v1970
    %v1972 = vpop.f32.mrb[0].mxu0
    %v1973 = vpop.f32.mrb[0].mxu0
    %1974 = vdwg.mxu0
    %1975 = vmatprep.subr.bf16.mxu0 %v1368
    %1976 = vmatpush1.bf16.msra.mxu0 %v1367
    %1977 = vmatprep.subr.bf16.mxu0 %v1375
    %1978 = vmatpush1.bf16.msra.mxu0 %v1374
    %1979 = vmatprep.subr.bf16.mxu0 %v1382
    %1980 = vmatpush1.bf16.msra.mxu0 %v1381
    %1981 = vmatprep.subr.bf16.mxu0 %v1389
    %1982 = vmatpush1.bf16.msra.mxu0 %v1388
    %1983 = vmatprep.subr.bf16.mxu0 %v1396
    %1984 = vmatpush1.bf16.msra.mxu0 %v1395
    %1985 = vmatprep.subr.bf16.mxu0 %v1403
    %1986 = vmatpush1.bf16.msra.mxu0 %v1402
    %1987 = vmatprep.subr.bf16.mxu0 %v1410
    %1988 = vmatpush1.bf16.msra.mxu0 %v1409
    %1989 = vmatprep.subr.bf16.mxu0 %v1417
    %1990 = vmatpush1.bf16.msra.mxu0 %v1416
    %1991 = vmatprep.subr.bf16.mxu0 %v1424
    %1992 = vmatpush1.bf16.msra.mxu0 %v1423
    %1993 = vmatprep.subr.bf16.mxu0 %v1431
    %1994 = vmatpush1.bf16.msra.mxu0 %v1430
    %1995 = vmatprep.subr.bf16.mxu0 %v1438
    %1996 = vmatpush1.bf16.msra.mxu0 %v1437
    %1997 = vmatprep.subr.bf16.mxu0 %v1445
    %1998 = vmatpush1.bf16.msra.mxu0 %v1444
    %1999 = vmatprep.subr.bf16.mxu0 %v1452
    %2000 = vmatpush1.bf16.msra.mxu0 %v1451
    %2001 = vmatprep.subr.bf16.mxu0 %v1459
    %2002 = vmatpush1.bf16.msra.mxu0 %v1458
    %2003 = vmatprep.subr.bf16.mxu0 %v1466
    %2004 = vmatpush1.bf16.msra.mxu0 %v1465
    %2005 = vmatprep.subr.bf16.mxu0 %v1473
    %2006 = vmatpush1.bf16.msra.mxu0 %v1472
    %2007 = vmatprep.mubr.bf16.mxu0 %v363
    %2008 = vmatmul.mubr.bf16.gmra.mrb[0].mxu0 %v362
    %v2009 = vpop.f32.mrb[0].mxu0
    %v2010 = vadd.f32 %v643, %v2009
    %v2011 = vpop.f32.mrb[0].mxu0
    %v2012 = vadd.f32 %v647, %v2011
    %v2013 = vpop.f32.mrb[0].mxu0
    %v2014 = vpop.f32.mrb[0].mxu0
    %2015 = vdwg.mxu0
    %2016 = vmatprep.subr.bf16.mxu0 %v1480
    %2017 = vmatpush1.bf16.msra.mxu0 %v1479
    %2018 = vmatprep.subr.bf16.mxu0 %v1487
    %2019 = vmatpush1.bf16.msra.mxu0 %v1486
    %2020 = vmatprep.subr.bf16.mxu0 %v1494
    %2021 = vmatpush1.bf16.msra.mxu0 %v1493
    %2022 = vmatprep.subr.bf16.mxu0 %v1501
    %2023 = vmatpush1.bf16.msra.mxu0 %v1500
    %2024 = vmatprep.subr.bf16.mxu0 %v1508
    %2025 = vmatpush1.bf16.msra.mxu0 %v1507
    %2026 = vmatprep.subr.bf16.mxu0 %v1515
    %2027 = vmatpush1.bf16.msra.mxu0 %v1514
    %2028 = vmatprep.subr.bf16.mxu0 %v1522
    %2029 = vmatpush1.bf16.msra.mxu0 %v1521
    %2030 = vmatprep.subr.bf16.mxu0 %v1529
    %2031 = vmatpush1.bf16.msra.mxu0 %v1528
    %2032 = vmatprep.subr.bf16.mxu0 %v1536
    %2033 = vmatpush1.bf16.msra.mxu0 %v1535
    %2034 = vmatprep.subr.bf16.mxu0 %v1543
    %2035 = vmatpush1.bf16.msra.mxu0 %v1542
    %2036 = vmatprep.subr.bf16.mxu0 %v1550
    %2037 = vmatpush1.bf16.msra.mxu0 %v1549
    %2038 = vmatprep.subr.bf16.mxu0 %v1557
    %2039 = vmatpush1.bf16.msra.mxu0 %v1556
    %2040 = vmatprep.subr.bf16.mxu0 %v1564
    %2041 = vmatpush1.bf16.msra.mxu0 %v1563
    %2042 = vmatprep.subr.bf16.mxu0 %v1571
    %2043 = vmatpush1.bf16.msra.mxu0 %v1570
    %2044 = vmatprep.subr.bf16.mxu0 %v1578
    %2045 = vmatpush1.bf16.msra.mxu0 %v1577
    %2046 = vmatprep.subr.bf16.mxu0 %v1585
    %2047 = vmatpush1.bf16.msra.mxu0 %v1584
    %2048 = vmatprep.mubr.bf16.mxu0 %v365
    %2049 = vmatmul.mubr.bf16.gmra.mrb[0].mxu0 %v364
    %v2050 = vpop.f32.mrb[0].mxu0
    %v2051 = vadd.f32 %v2010, %v2050
    %v2052 = vpop.f32.mrb[0].mxu0
    %v2053 = vadd.f32 %v2012, %v2052
    %v2054 = vpop.f32.mrb[0].mxu0
    %v2055 = vpop.f32.mrb[0].mxu0
    %2056 = vdwg.mxu0
    %2057 = vmatprep.subr.bf16.mxu0 0
    %2058 = vmatpush1.bf16.msra.mxu0 %v1369
    %2059 = vmatprep.subr.bf16.mxu0 0
    %2060 = vmatpush1.bf16.msra.mxu0 %v1376
    %2061 = vmatprep.subr.bf16.mxu0 0
    %2062 = vmatpush1.bf16.msra.mxu0 %v1383
    %2063 = vmatprep.subr.bf16.mxu0 0
    %2064 = vmatpush1.bf16.msra.mxu0 %v1390
    %2065 = vmatprep.subr.bf16.mxu0 0
    %2066 = vmatpush1.bf16.msra.mxu0 %v1397
    %2067 = vmatprep.subr.bf16.mxu0 0
    %2068 = vmatpush1.bf16.msra.mxu0 %v1404
    %2069 = vmatprep.subr.bf16.mxu0 0
    %2070 = vmatpush1.bf16.msra.mxu0 %v1411
    %2071 = vmatprep.subr.bf16.mxu0 0
    %2072 = vmatpush1.bf16.msra.mxu0 %v1418
    %2073 = vmatprep.subr.bf16.mxu0 0
    %2074 = vmatpush1.bf16.msra.mxu0 %v1425
    %2075 = vmatprep.subr.bf16.mxu0 0
    %2076 = vmatpush1.bf16.msra.mxu0 %v1432
    %2077 = vmatprep.subr.bf16.mxu0 0
    %2078 = vmatpush1.bf16.msra.mxu0 %v1439
    %2079 = vmatprep.subr.bf16.mxu0 0
    %2080 = vmatpush1.bf16.msra.mxu0 %v1446
    %2081 = vmatprep.subr.bf16.mxu0 0
    %2082 = vmatpush1.bf16.msra.mxu0 %v1453
    %2083 = vmatprep.subr.bf16.mxu0 0
    %2084 = vmatpush1.bf16.msra.mxu0 %v1460
    %2085 = vmatprep.subr.bf16.mxu0 0
    %2086 = vmatpush1.bf16.msra.mxu0 %v1467
    %2087 = vmatprep.subr.bf16.mxu0 0
    %2088 = vmatpush1.bf16.msra.mxu0 %v1474
    %2089 = vmatprep.mubr.bf16.mxu0 %v363
    %2090 = vmatmul.mubr.bf16.gmra.mrb[0].mxu0 %v362
    %v2091 = vpop.f32.mrb[0].mxu0
    %v2092 = vadd.f32 %v651, %v2091
    %v2093 = vpop.f32.mrb[0].mxu0
    %v2094 = vpop.f32.mrb[0].mxu0
    %v2095 = vpop.f32.mrb[0].mxu0
    %2096 = vdwg.mxu0
    %2097 = vmatprep.subr.bf16.mxu0 0
    %2098 = vmatpush1.bf16.msra.mxu0 %v1481
    %2099 = vmatprep.subr.bf16.mxu0 0
    %2100 = vmatpush1.bf16.msra.mxu0 %v1488
    %2101 = vmatprep.subr.bf16.mxu0 0
    %2102 = vmatpush1.bf16.msra.mxu0 %v1495
    %2103 = vmatprep.subr.bf16.mxu0 0
    %2104 = vmatpush1.bf16.msra.mxu0 %v1502
    %2105 = vmatprep.subr.bf16.mxu0 0
    %2106 = vmatpush1.bf16.msra.mxu0 %v1509
    %2107 = vmatprep.subr.bf16.mxu0 0
    %2108 = vmatpush1.bf16.msra.mxu0 %v1516
    %2109 = vmatprep.subr.bf16.mxu0 0
    %2110 = vmatpush1.bf16.msra.mxu0 %v1523
    %2111 = vmatprep.subr.bf16.mxu0 0
    %2112 = vmatpush1.bf16.msra.mxu0 %v1530
    %2113 = vmatprep.subr.bf16.mxu0 0
    %2114 = vmatpush1.bf16.msra.mxu0 %v1537
    %2115 = vmatprep.subr.bf16.mxu0 0
    %2116 = vmatpush1.bf16.msra.mxu0 %v1544
    %2117 = vmatprep.subr.bf16.mxu0 0
    %2118 = vmatpush1.bf16.msra.mxu0 %v1551
    %2119 = vmatprep.subr.bf16.mxu0 0
    %2120 = vmatpush1.bf16.msra.mxu0 %v1558
    %2121 = vmatprep.subr.bf16.mxu0 0
    %2122 = vmatpush1.bf16.msra.mxu0 %v1565
    %2123 = vmatprep.subr.bf16.mxu0 0
    %2124 = vmatpush1.bf16.msra.mxu0 %v1572
    %2125 = vmatprep.subr.bf16.mxu0 0
    %2126 = vmatpush1.bf16.msra.mxu0 %v1579
    %2127 = vmatprep.subr.bf16.mxu0 0
    %2128 = vmatpush1.bf16.msra.mxu0 %v1586
    %2129 = vmatprep.mubr.bf16.mxu0 %v365
    %2130 = vmatmul.mubr.bf16.gmra.mrb[0].mxu0 %v364
    %v2131 = vpop.f32.mrb[0].mxu0
    %v2132 = vadd.f32 %v2092, %v2131
    %v2133 = vpop.f32.mrb[0].mxu0
    %v2134 = vpop.f32.mrb[0].mxu0
    %v2135 = vpop.f32.mrb[0].mxu0
    %2136 = vdwg.mxu0
    %v2137 = vmul.f32 %v1887, 0.5
    %v2138 = vmul.f32 %v1889, 0.5
    %v2139 = vmul.f32 %v1969, 0.5
    %v2140 = vmul.f32 %v1971, 0.5
    %v2141 = vmul.f32 %v2051, 0.5
    %v2142 = vmul.f32 %v2053, 0.5
    %v2143 = vmul.f32 %v2132, 0.5
    %v2144 = vtanh.pop %v2137
    %v2145 = vtanh.pop %v2138
    %v2146 = vtanh.pop %v2139
    %v2147 = vtanh.pop %v2140
    %v2148 = vtanh.pop %v2141
    %v2149 = vtanh.pop %v2142
    %v2150 = vtanh.pop %v2143
    %v2151 = vmul.f32 %v2144, 0.5
    %v2152 = vmul.f32 %v2145, 0.5
    %v2153 = vmul.f32 %v2146, 0.5
    %v2154 = vmul.f32 %v2147, 0.5
    %v2155 = vmul.f32 %v2148, 0.5
    %v2156 = vmul.f32 %v2149, 0.5
    %v2157 = vmul.f32 %v2150, 0.5
    %v2158 = vadd.f32 %v2151, 0.5
    %v2159 = vadd.f32 %v2152, 0.5
    %v2160 = vadd.f32 %v2153, 0.5
    %v2161 = vadd.f32 %v2154, 0.5
    %v2162 = vadd.f32 %v2155, 0.5
    %v2163 = vadd.f32 %v2156, 0.5
    %v2164 = vadd.f32 %v2157, 0.5
    %v2165 = vpack.c.bf16 %v2158, %v2158
    %v2166 = vpack.c.bf16 %v2159, %v2159
    %v2167 = vpack.c.bf16 %v2160, %v2160
    %v2168 = vpack.c.bf16 %v2161, %v2161
    %v2169 = vpack.c.bf16 %v2162, %v2162
    %v2170 = vpack.c.bf16 %v2163, %v2163
    %v2171 = vpack.c.bf16 %v2164, %v2164
    %v2179 = vunpack.c.l.b16 %v2165
    %v2180 = vunpack.c.l.b16 %v2166
    %v2181 = vunpack.c.l.b16 %v2167
    %v2182 = vunpack.c.l.b16 %v2168
    %v2183 = vunpack.c.l.b16 %v2169
    %v2184 = vunpack.c.l.b16 %v2170
    %v2185 = vunpack.c.l.b16 %v2171
    %v2186 = vpack.c.b16 %v2180, %v2179
    %v2187 = vpack.c.b16 %v2182, %v2181
    %v2188 = vpack.c.b16 %v2184, %v2183
    %v2189 = vpack.c.b16 %v2185, %v2185
    %2194 = vst [vmem:[#allocation8] sm:$0xff] %v2186
    %2195 = vst [vmem:[#allocation8 + $0x8] sm:$0xff] %v2187
    %2196 = vst [vmem:[#allocation8 + $0x10] sm:$0xff] %v2188
    %2197 = vst [vmem:[#allocation8 + $0x18] sm:$0xf] %v2189
    // Predicated region
    $region34: #{tpu_custom_call.1} parent=1 // pred_check
      _
    $region35: #{tpu_custom_call.1} parent=1 // pred_check_branch
      %2199 = sbr.rel (0) target = $region37
    $region36: #{tpu_custom_call.1} parent=1 // pred_region
      %s2201 = ssub.s32 448, 448
      %2202 = vsyncadd [#allocation4], %s2201
      %s2204 = sshll.u32 [#allocation8], 4
      %s2205 = int_to_ptr.vmem [resolvable:$true] %s2204
      %2207 = dma.vmem_to_hbm [thread:$0]  %s2205, 448, %s5, [#allocation4]
    $region37: #{tpu_custom_call.1} parent=1 // pred_fallthru
      _
    // Predicated region
    $region38: #{tpu_custom_call.1} parent=1 // pred_check
      _
    $region39: #{tpu_custom_call.1} parent=1 // pred_check_branch
      %2209 = sbr.rel (0) target = $region41
    $region40: #{tpu_custom_call.1} parent=1 // pred_region
      %2210 = dma.done [#allocation4], 448
    $region41: #{tpu_custom_call.1} parent=1 // pred_fallthru
      _
    %2211 = vsyncpa [#allocation3], 1
    %2212 = vsyncpa [#allocation6], 1
    %2213 = vsyncpa [#allocation4], 1

</llo_original>
